<compile_context>
chip_gen: v7x
topology: tpu7x:2x2x1
jax: 0.10.0
libtpu: 0.0.40
codegen_flags: <defaults>
</compile_context>

<pallas_src>
import math

import numpy as np

import jax
import jax.numpy as jnp
from jax import lax
from jax.experimental import pallas as pl
from jax.experimental.pallas import tpu as pltpu

_T = 216                  # Euler steps / output samples per beat
_TP = 256                 # time axis padded to a lane multiple inside the kernel
_H = 1.0 / 216.0
_X0 = -0.417750770388669
_Y0 = -0.9085616622823985
_A_RESP = 0.005           # ODEParams.A   (respiratory baseline amplitude, mV)
_F2 = 0.25                # ODEParams.f2  (respiratory frequency, Hz)
_TWO_PI = 2.0 * math.pi
_INV_2PI = 1.0 / _TWO_PI
_MIN_VAL = -0.01563       # scale_signal defaults
_MAX_VAL = 0.042557
# TODO(synk): ODEParams.rrpc (stochastic RR-interval process) is not part of the
# given source; it is approximated with a constant unit RR interval -> omega = 2*pi.
_OMEGA = _TWO_PI

_CHUNK = 32               # batch rows per fused inner step (multiple of 8)
_BM_MAX = 512             # max batch rows per grid step


def _precompute_constants():
    """Batch/parameter-invariant trajectories and recurrence matrices.

    theta_n = atan2(y_n, x_n) and hz0_n = H * A * sin(2*pi*f2*t_n) for n < 216.
    Lt[k, n] = (1-H)^(n-k) for n >= k (else 0) so that z = rhs @ Lt + v0*(1-H)^(n+1).
    Everything is padded to _TP lanes: padded rows of Lt are zero (so garbage rhs
    columns contribute nothing) and padded columns replicate column 215 (so the
    padded output columns equal z[:, 215] and never perturb the per-beat min/max).
    """
    thetas = np.zeros(_TP, np.float64)
    hz0 = np.zeros(_TP, np.float64)
    x, y = _X0, _Y0
    for n in range(_T):
        t = n * _H
        thetas[n] = math.atan2(y, x)
        hz0[n] = _H * _A_RESP * math.sin(_TWO_PI * _F2 * t)
        alpha = 1.0 - math.sqrt(x * x + y * y)
        x, y = (x + _H * (alpha * x - _OMEGA * y),
                y + _H * (alpha * y + _OMEGA * x))

    r = 1.0 - _H
    idx = np.arange(_T)
    expo = idx[None, :] - idx[:, None]                   # Lt[k, n] -> n - k
    lt = np.where(expo >= 0, np.power(r, np.maximum(expo, 0)), 0.0)   # (216, 216)
    rpow = np.power(r, idx + 1.0)                                      # (216,)

    lt_pad = np.zeros((_TP, _TP), np.float64)
    lt_pad[:_T, :_T] = lt
    lt_pad[:_T, _T:] = lt[:, _T - 1:_T]                  # replicate column 215
    rpow_pad = np.zeros(_TP, np.float64)
    rpow_pad[:_T] = rpow
    rpow_pad[_T:] = rpow[_T - 1]

    return (thetas.reshape(1, _TP).astype(np.float32),
            hz0.reshape(1, _TP).astype(np.float32),
            rpow_pad.reshape(1, _TP).astype(np.float32),
            lt_pad.astype(np.float32))


_THETA_NP, _HZ0_NP, _RPOW_NP, _LT_NP = _precompute_constants()


def _fmod2pi(x):
    # torch.fmod(x, 2*pi) semantics (remainder keeps the sign of the dividend).
    return x - jnp.trunc(x * jnp.float32(_INV_2PI)) * jnp.float32(_TWO_PI)


def _euler_kernel(theta_ref, hz0_ref, rpow_ref, lt_ref, p_ref, v0_ref, o_ref):
    bm = o_ref.shape[0]
    nchunks = bm // _CHUNK

    def chunk_body(c, carry):
        base = pl.multiple_of(c * _CHUNK, _CHUNK)
        p = p_ref[pl.ds(base, _CHUNK), :]                    # (CHUNK, 15)
        v0 = v0_ref[pl.ds(base, _CHUNK), :]                  # (CHUNK, 1)
        theta = jnp.broadcast_to(theta_ref[...], (_CHUNK, _TP))   # hoisted bcast

        # --- Gaussian wave sum acc(b, t) over the whole (padded) beat --------
        acc = jnp.zeros((_CHUNK, _TP), jnp.float32)
        for k in range(5):                                   # P, Q, R, S, T waves
            a_i = p[:, 3 * k:3 * k + 1]                      # (CHUNK, 1)
            b_i = p[:, 3 * k + 1:3 * k + 2]
            th_i = p[:, 3 * k + 2:3 * k + 3]
            inv_2b2 = jnp.float32(0.5) * pl.reciprocal(b_i * b_i, approx=True)
            d = _fmod2pi(theta - th_i)                       # (CHUNK, TP)
            acc = acc + (a_i * d) * jnp.exp(-(d * d) * inv_2b2)

        # --- recurrence as one MXU matmul ------------------------------------
        # rhs_n = H*(z0_n - acc_n);  z_n = sum_k rhs_k (1-H)^(n-k) + v0 (1-H)^(n+1)
        rhs = hz0_ref[...] - jnp.float32(_H) * acc           # (CHUNK, TP)
        z = jnp.dot(rhs, lt_ref[...],
                    precision=lax.Precision.HIGHEST,
                    preferred_element_type=jnp.float32)
        z = z + v0 * rpow_ref[...]

        # --- scale_signal: per-beat min/max rescale ---------------------------
        zmin = jnp.min(z, axis=1, keepdims=True)             # (CHUNK, 1)
        zmax = jnp.max(z, axis=1, keepdims=True)
        denom = zmax - zmin
        denom = jnp.where(denom == 0.0, jnp.float32(1.0), denom)   # degenerate guard
        scale = jnp.float32(_MAX_VAL) * pl.reciprocal(denom, approx=True)
        o_ref[pl.ds(base, _CHUNK), :] = (z - zmin) * scale + jnp.float32(_MIN_VAL)
        return carry

    lax.fori_loop(0, nchunks, chunk_body, 0)


def _round_up(x, m):
    return ((x + m - 1) // m) * m


def euler_forward(params_batch, v0):
    """params_batch: (B, 15) f32, v0: (B,) f32  ->  (B, 216) f32."""
    params_batch = jnp.asarray(params_batch, jnp.float32)
    v0 = jnp.asarray(v0, jnp.float32)
    b = params_batch.shape[0]

    # Block-size selection: large blocks to amortize per-grid-step overhead,
    # but keep >= 2 grid steps when the batch allows so the "parallel" axis can
    # be split across both TensorCores on v7x.
    b_chunks = _round_up(b, _CHUNK)
    if b_chunks <= _CHUNK:
        bm = _CHUNK
    elif b_chunks <= 2 * _BM_MAX:
        bm = _round_up(b_chunks // 2, _CHUNK)
    else:
        bm = _BM_MAX
    b_pad = _round_up(b, bm)
    nblk = b_pad // bm

    # Pad batch rows; padded rows get benign params (=1) and v0 = 0.
    p = jnp.ones((b_pad, 15), jnp.float32).at[:b, :].set(params_batch)
    v = jnp.zeros((b_pad, 1), jnp.float32).at[:b, 0].set(v0)
    theta_row = jnp.asarray(_THETA_NP)                       # (1, 256)
    hz0_row = jnp.asarray(_HZ0_NP)                           # (1, 256)
    rpow_row = jnp.asarray(_RPOW_NP)                         # (1, 256)
    lt = jnp.asarray(_LT_NP)                                 # (256, 256)

    out = pl.pallas_call(
        _euler_kernel,
        out_shape=jax.ShapeDtypeStruct((b_pad, _TP), jnp.float32),
        grid_spec=pltpu.PrefetchScalarGridSpec(
            num_scalar_prefetch=0,
            grid=(nblk,),
            in_specs=[
                pl.BlockSpec((1, _TP), lambda i: (0, 0)),    # theta_t
                pl.BlockSpec((1, _TP), lambda i: (0, 0)),    # H * z0_t
                pl.BlockSpec((1, _TP), lambda i: (0, 0)),    # (1-H)^(n+1)
                pl.BlockSpec((_TP, _TP), lambda i: (0, 0)),  # L^T power matrix
                pl.BlockSpec((bm, 15), lambda i: (i, 0)),    # wave params
                pl.BlockSpec((bm, 1), lambda i: (i, 0)),     # v0
            ],
            out_specs=pl.BlockSpec((bm, _TP), lambda i: (i, 0)),
        ),
        compiler_params=pltpu.CompilerParams(
            dimension_semantics=("parallel",)),
    )(theta_row, hz0_row, rpow_row, lt, p, v)
    return out[:b, :_T]                                      # (B, 216)


def euler_ref(params_batch, v0):
    """Pure-JAX reference mirroring the PyTorch forward (sequential, f32)."""
    params_batch = params_batch.astype(jnp.float32)
    v0 = v0.astype(jnp.float32)
    b = params_batch.shape[0]
    x = jnp.full((b,), _X0, jnp.float32)
    y = jnp.full((b,), _Y0, jnp.float32)
    z = v0

    def single_step(x, y, z, t):
        alpha = 1.0 - jnp.sqrt(x * x + y * y)
        f_x = alpha * x - _OMEGA * y
        f_y = alpha * y + _OMEGA * x
        theta = jnp.arctan2(y, x)
        acc = jnp.zeros_like(z)
        for k in range(5):
            a_i = params_batch[:, 3 * k]
            b_i = params_batch[:, 3 * k + 1]
            th_i = params_batch[:, 3 * k + 2]
            dth = _fmod2pi(theta - th_i)
            acc = acc + a_i * dth * jnp.exp(-(dth * dth) / (2.0 * b_i * b_i))
        z0 = _A_RESP * jnp.sin(_TWO_PI * _F2 * t)
        f_z = -acc - (z - z0)
        return x + _H * f_x, y + _H * f_y, z + _H * f_z

    def scan_body(carry, i):
        x, y, z, t = carry
        t = jnp.where(i == 0, t, t + jnp.float32(_H))
        x, y, z = single_step(x, y, z, t)
        return (x, y, z, t), z

    _, zs = lax.scan(scan_body, (x, y, z, jnp.float32(0.0)), jnp.arange(_T))
    zs = zs.T                                                # (B, T)
    zmin = zs.min(axis=1, keepdims=True)
    zmax = zs.max(axis=1, keepdims=True)
    return (zs - zmin) * _MAX_VAL / (zmax - zmin) + _MIN_VAL


if __name__ == "__main__":
    key = jax.random.PRNGKey(0)
    k1, k2 = jax.random.split(key)
    B = 4
    # deterministic, physiologically plausible base params: (a_i, b_i, theta_i) per wave
    a_base = jnp.array([1.2, -5.0, 30.0, -7.5, 0.75], jnp.float32)
    b_base = jnp.array([0.25, 0.1, 0.1, 0.1, 0.4], jnp.float32)
    th_base = jnp.array([-math.pi / 3, -math.pi / 12, 0.0, math.pi / 12, math.pi / 2],
                        jnp.float32)
    base = jnp.stack([a_base, b_base, th_base], axis=1).reshape(-1)   # (15,)
    params_batch = base[None, :] + 0.01 * jax.random.normal(k1, (B, 15), jnp.float32)
    v0 = 0.02 * jax.random.normal(k2, (B,), jnp.float32)

    out = euler_forward(params_batch, v0)
    out = jax.block_until_ready(out)
    assert out.shape == (B, _T), out.shape

    ref = euler_ref(params_batch, v0)
    err = float(jnp.max(jnp.abs(out - ref)))
    if not bool(jnp.allclose(out, ref, rtol=1e-3, atol=2e-3)):
        raise AssertionError(f"kernel/reference mismatch, max abs err = {err}")
    print("KERNEL_OK")
</pallas_src>

<mosaic_0001>
module attributes {stable_mosaic.version = 11 : i64} {
  func.func @_euler_kernel(%arg0: i32, %arg1: memref<1x256xf32, #tpu.memory_space<vmem>>, %arg2: memref<1x256xf32, #tpu.memory_space<vmem>>, %arg3: memref<1x256xf32, #tpu.memory_space<vmem>>, %arg4: memref<256x256xf32, #tpu.memory_space<vmem>>, %arg5: memref<32x15xf32, #tpu.memory_space<vmem>>, %arg6: memref<32x1xf32, #tpu.memory_space<vmem>>, %arg7: memref<32x256xf32, #tpu.memory_space<vmem>>) attributes {dimension_semantics = [#tpu.dimension_semantics<parallel>], iteration_bounds = array<i64: 1>, scalar_prefetch = 0 : i64, scratch_operands = 0 : i64, tpu.core_type = #tpu.core_type<tc>, window_params = [{pipeline_mode = #tpu.pipeline_mode<synchronous>, transform_indices = @transform_0, window_bounds = array<i64: 1, 256>}, {pipeline_mode = #tpu.pipeline_mode<synchronous>, transform_indices = @transform_1, window_bounds = array<i64: 1, 256>}, {pipeline_mode = #tpu.pipeline_mode<synchronous>, transform_indices = @transform_2, window_bounds = array<i64: 1, 256>}, {pipeline_mode = #tpu.pipeline_mode<synchronous>, transform_indices = @transform_3, window_bounds = array<i64: 256, 256>}, {transform_indices = @transform_4, window_bounds = array<i64: 32, 15>}, {transform_indices = @transform_5, window_bounds = array<i64: 32, 1>}, {transform_indices = @transform_6, window_bounds = array<i64: 32, 256>}]} {
    %c0_i32 = arith.constant 0 : i32
    %c32_i32 = arith.constant 32 : i32
    %0 = arith.muli %c0_i32, %c32_i32 : i32
    %1 = tpu.assume_multiple %0, 32 : i32
    %2 = arith.index_cast %1 : i32 to index
    %c0 = arith.constant 0 : index
    %3 = vector.load %arg5[%2, %c0] : memref<32x15xf32, #tpu.memory_space<vmem>>, vector<32x15xf32>
    %4 = arith.index_cast %1 : i32 to index
    %c0_0 = arith.constant 0 : index
    %5 = vector.load %arg6[%4, %c0_0] : memref<32x1xf32, #tpu.memory_space<vmem>>, vector<32x1xf32>
    %c0_1 = arith.constant 0 : index
    %c0_2 = arith.constant 0 : index
    %6 = vector.load %arg1[%c0_1, %c0_2] : memref<1x256xf32, #tpu.memory_space<vmem>>, vector<1x256xf32>
    %7 = vector.shape_cast %6 : vector<1x256xf32> to vector<1x256xf32>
    %8 = vector.broadcast %7 : vector<1x256xf32> to vector<32x256xf32>
    %cst = arith.constant 0.000000e+00 : f32
    %9 = vector.broadcast %cst : f32 to vector<32x256xf32>
    %10 = vector.extract_strided_slice %3 {offsets = [0, 0], sizes = [32, 1], strides = [1, 1]} : vector<32x15xf32> to vector<32x1xf32>
    %11 = vector.extract_strided_slice %3 {offsets = [0, 1], sizes = [32, 1], strides = [1, 1]} : vector<32x15xf32> to vector<32x1xf32>
    %12 = vector.extract_strided_slice %3 {offsets = [0, 2], sizes = [32, 1], strides = [1, 1]} : vector<32x15xf32> to vector<32x1xf32>
    %13 = arith.mulf %11, %11 : vector<32x1xf32>
    %14 = tpu.reciprocal %13 {approx = true} : vector<32x1xf32> -> vector<32x1xf32>
    %cst_3 = arith.constant 5.000000e-01 : f32
    %15 = vector.broadcast %cst_3 : f32 to vector<32x1xf32>
    %16 = arith.mulf %15, %14 : vector<32x1xf32>
    %17 = vector.broadcast %12 : vector<32x1xf32> to vector<32x256xf32>
    %18 = arith.subf %8, %17 : vector<32x256xf32>
    %cst_4 = arith.constant 0.159154937 : f32
    %19 = vector.broadcast %cst_4 : f32 to vector<32x256xf32>
    %20 = arith.mulf %18, %19 : vector<32x256xf32>
    %cst_5 = arith.constant 0.000000e+00 : f32
    %21 = vector.broadcast %cst_5 : f32 to vector<32x256xf32>
    %22 = arith.cmpf olt, %20, %21 : vector<32x256xf32>
    %23 = math.ceil %20 : vector<32x256xf32>
    %24 = math.floor %20 : vector<32x256xf32>
    %25 = arith.select %22, %23, %24 : vector<32x256xi1>, vector<32x256xf32>
    %cst_6 = arith.constant 6.28318548 : f32
    %26 = vector.broadcast %cst_6 : f32 to vector<32x256xf32>
    %27 = arith.mulf %25, %26 : vector<32x256xf32>
    %28 = arith.subf %18, %27 : vector<32x256xf32>
    %29 = vector.broadcast %10 : vector<32x1xf32> to vector<32x256xf32>
    %30 = arith.mulf %29, %28 : vector<32x256xf32>
    %31 = arith.mulf %28, %28 : vector<32x256xf32>
    %cst_7 = arith.constant 0.000000e+00 : f32
    %32 = vector.broadcast %cst_7 : f32 to vector<32x256xf32>
    %33 = arith.subf %32, %31 : vector<32x256xf32>
    %34 = vector.broadcast %16 : vector<32x1xf32> to vector<32x256xf32>
    %35 = arith.mulf %33, %34 : vector<32x256xf32>
    %36 = math.exp %35 : vector<32x256xf32>
    %37 = arith.mulf %30, %36 : vector<32x256xf32>
    %38 = arith.addf %9, %37 : vector<32x256xf32>
    %39 = vector.extract_strided_slice %3 {offsets = [0, 3], sizes = [32, 1], strides = [1, 1]} : vector<32x15xf32> to vector<32x1xf32>
    %40 = vector.extract_strided_slice %3 {offsets = [0, 4], sizes = [32, 1], strides = [1, 1]} : vector<32x15xf32> to vector<32x1xf32>
    %41 = vector.extract_strided_slice %3 {offsets = [0, 5], sizes = [32, 1], strides = [1, 1]} : vector<32x15xf32> to vector<32x1xf32>
    %42 = arith.mulf %40, %40 : vector<32x1xf32>
    %43 = tpu.reciprocal %42 {approx = true} : vector<32x1xf32> -> vector<32x1xf32>
    %cst_8 = arith.constant 5.000000e-01 : f32
    %44 = vector.broadcast %cst_8 : f32 to vector<32x1xf32>
    %45 = arith.mulf %44, %43 : vector<32x1xf32>
    %46 = vector.broadcast %41 : vector<32x1xf32> to vector<32x256xf32>
    %47 = arith.subf %8, %46 : vector<32x256xf32>
    %cst_9 = arith.constant 0.159154937 : f32
    %48 = vector.broadcast %cst_9 : f32 to vector<32x256xf32>
    %49 = arith.mulf %47, %48 : vector<32x256xf32>
    %cst_10 = arith.constant 0.000000e+00 : f32
    %50 = vector.broadcast %cst_10 : f32 to vector<32x256xf32>
    %51 = arith.cmpf olt, %49, %50 : vector<32x256xf32>
    %52 = math.ceil %49 : vector<32x256xf32>
    %53 = math.floor %49 : vector<32x256xf32>
    %54 = arith.select %51, %52, %53 : vector<32x256xi1>, vector<32x256xf32>
    %cst_11 = arith.constant 6.28318548 : f32
    %55 = vector.broadcast %cst_11 : f32 to vector<32x256xf32>
    %56 = arith.mulf %54, %55 : vector<32x256xf32>
    %57 = arith.subf %47, %56 : vector<32x256xf32>
    %58 = vector.broadcast %39 : vector<32x1xf32> to vector<32x256xf32>
    %59 = arith.mulf %58, %57 : vector<32x256xf32>
    %60 = arith.mulf %57, %57 : vector<32x256xf32>
    %cst_12 = arith.constant 0.000000e+00 : f32
    %61 = vector.broadcast %cst_12 : f32 to vector<32x256xf32>
    %62 = arith.subf %61, %60 : vector<32x256xf32>
    %63 = vector.broadcast %45 : vector<32x1xf32> to vector<32x256xf32>
    %64 = arith.mulf %62, %63 : vector<32x256xf32>
    %65 = math.exp %64 : vector<32x256xf32>
    %66 = arith.mulf %59, %65 : vector<32x256xf32>
    %67 = arith.addf %38, %66 : vector<32x256xf32>
    %68 = vector.extract_strided_slice %3 {offsets = [0, 6], sizes = [32, 1], strides = [1, 1]} : vector<32x15xf32> to vector<32x1xf32>
    %69 = vector.extract_strided_slice %3 {offsets = [0, 7], sizes = [32, 1], strides = [1, 1]} : vector<32x15xf32> to vector<32x1xf32>
    %70 = vector.extract_strided_slice %3 {offsets = [0, 8], sizes = [32, 1], strides = [1, 1]} : vector<32x15xf32> to vector<32x1xf32>
    %71 = arith.mulf %69, %69 : vector<32x1xf32>
    %72 = tpu.reciprocal %71 {approx = true} : vector<32x1xf32> -> vector<32x1xf32>
    %cst_13 = arith.constant 5.000000e-01 : f32
    %73 = vector.broadcast %cst_13 : f32 to vector<32x1xf32>
    %74 = arith.mulf %73, %72 : vector<32x1xf32>
    %75 = vector.broadcast %70 : vector<32x1xf32> to vector<32x256xf32>
    %76 = arith.subf %8, %75 : vector<32x256xf32>
    %cst_14 = arith.constant 0.159154937 : f32
    %77 = vector.broadcast %cst_14 : f32 to vector<32x256xf32>
    %78 = arith.mulf %76, %77 : vector<32x256xf32>
    %cst_15 = arith.constant 0.000000e+00 : f32
    %79 = vector.broadcast %cst_15 : f32 to vector<32x256xf32>
    %80 = arith.cmpf olt, %78, %79 : vector<32x256xf32>
    %81 = math.ceil %78 : vector<32x256xf32>
    %82 = math.floor %78 : vector<32x256xf32>
    %83 = arith.select %80, %81, %82 : vector<32x256xi1>, vector<32x256xf32>
    %cst_16 = arith.constant 6.28318548 : f32
    %84 = vector.broadcast %cst_16 : f32 to vector<32x256xf32>
    %85 = arith.mulf %83, %84 : vector<32x256xf32>
    %86 = arith.subf %76, %85 : vector<32x256xf32>
    %87 = vector.broadcast %68 : vector<32x1xf32> to vector<32x256xf32>
    %88 = arith.mulf %87, %86 : vector<32x256xf32>
    %89 = arith.mulf %86, %86 : vector<32x256xf32>
    %cst_17 = arith.constant 0.000000e+00 : f32
    %90 = vector.broadcast %cst_17 : f32 to vector<32x256xf32>
    %91 = arith.subf %90, %89 : vector<32x256xf32>
    %92 = vector.broadcast %74 : vector<32x1xf32> to vector<32x256xf32>
    %93 = arith.mulf %91, %92 : vector<32x256xf32>
    %94 = math.exp %93 : vector<32x256xf32>
    %95 = arith.mulf %88, %94 : vector<32x256xf32>
    %96 = arith.addf %67, %95 : vector<32x256xf32>
    %97 = vector.extract_strided_slice %3 {offsets = [0, 9], sizes = [32, 1], strides = [1, 1]} : vector<32x15xf32> to vector<32x1xf32>
    %98 = vector.extract_strided_slice %3 {offsets = [0, 10], sizes = [32, 1], strides = [1, 1]} : vector<32x15xf32> to vector<32x1xf32>
    %99 = vector.extract_strided_slice %3 {offsets = [0, 11], sizes = [32, 1], strides = [1, 1]} : vector<32x15xf32> to vector<32x1xf32>
    %100 = arith.mulf %98, %98 : vector<32x1xf32>
    %101 = tpu.reciprocal %100 {approx = true} : vector<32x1xf32> -> vector<32x1xf32>
    %cst_18 = arith.constant 5.000000e-01 : f32
    %102 = vector.broadcast %cst_18 : f32 to vector<32x1xf32>
    %103 = arith.mulf %102, %101 : vector<32x1xf32>
    %104 = vector.broadcast %99 : vector<32x1xf32> to vector<32x256xf32>
    %105 = arith.subf %8, %104 : vector<32x256xf32>
    %cst_19 = arith.constant 0.159154937 : f32
    %106 = vector.broadcast %cst_19 : f32 to vector<32x256xf32>
    %107 = arith.mulf %105, %106 : vector<32x256xf32>
    %cst_20 = arith.constant 0.000000e+00 : f32
    %108 = vector.broadcast %cst_20 : f32 to vector<32x256xf32>
    %109 = arith.cmpf olt, %107, %108 : vector<32x256xf32>
    %110 = math.ceil %107 : vector<32x256xf32>
    %111 = math.floor %107 : vector<32x256xf32>
    %112 = arith.select %109, %110, %111 : vector<32x256xi1>, vector<32x256xf32>
    %cst_21 = arith.constant 6.28318548 : f32
    %113 = vector.broadcast %cst_21 : f32 to vector<32x256xf32>
    %114 = arith.mulf %112, %113 : vector<32x256xf32>
    %115 = arith.subf %105, %114 : vector<32x256xf32>
    %116 = vector.broadcast %97 : vector<32x1xf32> to vector<32x256xf32>
    %117 = arith.mulf %116, %115 : vector<32x256xf32>
    %118 = arith.mulf %115, %115 : vector<32x256xf32>
    %cst_22 = arith.constant 0.000000e+00 : f32
    %119 = vector.broadcast %cst_22 : f32 to vector<32x256xf32>
    %120 = arith.subf %119, %118 : vector<32x256xf32>
    %121 = vector.broadcast %103 : vector<32x1xf32> to vector<32x256xf32>
    %122 = arith.mulf %120, %121 : vector<32x256xf32>
    %123 = math.exp %122 : vector<32x256xf32>
    %124 = arith.mulf %117, %123 : vector<32x256xf32>
    %125 = arith.addf %96, %124 : vector<32x256xf32>
    %126 = vector.extract_strided_slice %3 {offsets = [0, 12], sizes = [32, 1], strides = [1, 1]} : vector<32x15xf32> to vector<32x1xf32>
    %127 = vector.extract_strided_slice %3 {offsets = [0, 13], sizes = [32, 1], strides = [1, 1]} : vector<32x15xf32> to vector<32x1xf32>
    %128 = vector.extract_strided_slice %3 {offsets = [0, 14], sizes = [32, 1], strides = [1, 1]} : vector<32x15xf32> to vector<32x1xf32>
    %129 = arith.mulf %127, %127 : vector<32x1xf32>
    %130 = tpu.reciprocal %129 {approx = true} : vector<32x1xf32> -> vector<32x1xf32>
    %cst_23 = arith.constant 5.000000e-01 : f32
    %131 = vector.broadcast %cst_23 : f32 to vector<32x1xf32>
    %132 = arith.mulf %131, %130 : vector<32x1xf32>
    %133 = vector.broadcast %128 : vector<32x1xf32> to vector<32x256xf32>
    %134 = arith.subf %8, %133 : vector<32x256xf32>
    %cst_24 = arith.constant 0.159154937 : f32
    %135 = vector.broadcast %cst_24 : f32 to vector<32x256xf32>
    %136 = arith.mulf %134, %135 : vector<32x256xf32>
    %cst_25 = arith.constant 0.000000e+00 : f32
    %137 = vector.broadcast %cst_25 : f32 to vector<32x256xf32>
    %138 = arith.cmpf olt, %136, %137 : vector<32x256xf32>
    %139 = math.ceil %136 : vector<32x256xf32>
    %140 = math.floor %136 : vector<32x256xf32>
    %141 = arith.select %138, %139, %140 : vector<32x256xi1>, vector<32x256xf32>
    %cst_26 = arith.constant 6.28318548 : f32
    %142 = vector.broadcast %cst_26 : f32 to vector<32x256xf32>
    %143 = arith.mulf %141, %142 : vector<32x256xf32>
    %144 = arith.subf %134, %143 : vector<32x256xf32>
    %145 = vector.broadcast %126 : vector<32x1xf32> to vector<32x256xf32>
    %146 = arith.mulf %145, %144 : vector<32x256xf32>
    %147 = arith.mulf %144, %144 : vector<32x256xf32>
    %cst_27 = arith.constant 0.000000e+00 : f32
    %148 = vector.broadcast %cst_27 : f32 to vector<32x256xf32>
    %149 = arith.subf %148, %147 : vector<32x256xf32>
    %150 = vector.broadcast %132 : vector<32x1xf32> to vector<32x256xf32>
    %151 = arith.mulf %149, %150 : vector<32x256xf32>
    %152 = math.exp %151 : vector<32x256xf32>
    %153 = arith.mulf %146, %152 : vector<32x256xf32>
    %154 = arith.addf %125, %153 : vector<32x256xf32>
    %c0_28 = arith.constant 0 : index
    %c0_29 = arith.constant 0 : index
    %155 = vector.load %arg2[%c0_28, %c0_29] : memref<1x256xf32, #tpu.memory_space<vmem>>, vector<1x256xf32>
    %cst_30 = arith.constant 0.00462962966 : f32
    %156 = vector.broadcast %cst_30 : f32 to vector<32x256xf32>
    %157 = arith.mulf %156, %154 : vector<32x256xf32>
    %158 = vector.broadcast %155 : vector<1x256xf32> to vector<32x256xf32>
    %159 = arith.subf %158, %157 : vector<32x256xf32>
    %c0_31 = arith.constant 0 : index
    %c0_32 = arith.constant 0 : index
    %160 = vector.load %arg4[%c0_31, %c0_32] : memref<256x256xf32, #tpu.memory_space<vmem>>, vector<256x256xf32>
    %cst_33 = arith.constant dense<0.000000e+00> : vector<32x256xf32>
    %161 = tpu.matmul %159, %160, %cst_33 {dimension_numbers = #tpu.dot_dimension_numbers<[1], [0], [0], [1], [0, 0, 1, 1], [], []>, precision = #tpu.contract_precision<fp32>} : vector<32x256xf32>, vector<256x256xf32>, vector<32x256xf32> -> vector<32x256xf32>
    %c0_34 = arith.constant 0 : index
    %c0_35 = arith.constant 0 : index
    %162 = vector.load %arg3[%c0_34, %c0_35] : memref<1x256xf32, #tpu.memory_space<vmem>>, vector<1x256xf32>
    %163 = vector.broadcast %5 : vector<32x1xf32> to vector<32x256xf32>
    %164 = vector.broadcast %162 : vector<1x256xf32> to vector<32x256xf32>
    %165 = arith.mulf %163, %164 : vector<32x256xf32>
    %166 = arith.addf %161, %165 : vector<32x256xf32>
    %cst_36 = arith.constant dense<0x7F800000> : vector<32xf32>
    %167 = vector.multi_reduction <minimumf>, %166, %cst_36 [1] : vector<32x256xf32> to vector<32xf32>
    %168 = vector.shape_cast %167 : vector<32xf32> to vector<32x1xf32>
    %cst_37 = arith.constant dense<0xFF800000> : vector<32xf32>
    %169 = vector.multi_reduction <maximumf>, %166, %cst_37 [1] : vector<32x256xf32> to vector<32xf32>
    %170 = vector.shape_cast %169 : vector<32xf32> to vector<32x1xf32>
    %171 = arith.subf %170, %168 : vector<32x1xf32>
    %cst_38 = arith.constant 0.000000e+00 : f32
    %172 = vector.broadcast %cst_38 : f32 to vector<32x1xf32>
    %173 = arith.cmpf oeq, %171, %172 : vector<32x1xf32>
    %cst_39 = arith.constant 1.000000e+00 : f32
    %174 = vector.broadcast %cst_39 : f32 to vector<32x1xf32>
    %175 = arith.select %173, %174, %171 : vector<32x1xi1>, vector<32x1xf32>
    %176 = tpu.reciprocal %175 {approx = true} : vector<32x1xf32> -> vector<32x1xf32>
    %cst_40 = arith.constant 4.255700e-02 : f32
    %177 = vector.broadcast %cst_40 : f32 to vector<32x1xf32>
    %178 = arith.mulf %177, %176 : vector<32x1xf32>
    %179 = vector.broadcast %168 : vector<32x1xf32> to vector<32x256xf32>
    %180 = arith.subf %166, %179 : vector<32x256xf32>
    %181 = vector.broadcast %178 : vector<32x1xf32> to vector<32x256xf32>
    %182 = arith.mulf %180, %181 : vector<32x256xf32>
    %cst_41 = arith.constant -1.563000e-02 : f32
    %183 = vector.broadcast %cst_41 : f32 to vector<32x256xf32>
    %184 = arith.addf %182, %183 : vector<32x256xf32>
    %185 = arith.index_cast %1 : i32 to index
    %c0_42 = arith.constant 0 : index
    %186 = vector.load %arg7[%185, %c0_42] : memref<32x256xf32, #tpu.memory_space<vmem>>, vector<32x256xf32>
    tpu.vector_store %arg7[%185, %c0_42], %184 {strides = array<i32>} : memref<32x256xf32, #tpu.memory_space<vmem>>, vector<32x256xf32>,
    %c1_i32 = arith.constant 1 : i32
    return
  }
  func.func @transform_0(%arg0: i32) -> (i32, i32) {
    %c0_i32 = arith.constant 0 : i32
    %c0_i32_0 = arith.constant 0 : i32
    %c0_i32_1 = arith.constant 0 : i32
    return %c0_i32, %c0_i32_0 : i32, i32
  }
  func.func @transform_1(%arg0: i32) -> (i32, i32) {
    %c0_i32 = arith.constant 0 : i32
    %c0_i32_0 = arith.constant 0 : i32
    %c0_i32_1 = arith.constant 0 : i32
    return %c0_i32, %c0_i32_0 : i32, i32
  }
  func.func @transform_2(%arg0: i32) -> (i32, i32) {
    %c0_i32 = arith.constant 0 : i32
    %c0_i32_0 = arith.constant 0 : i32
    %c0_i32_1 = arith.constant 0 : i32
    return %c0_i32, %c0_i32_0 : i32, i32
  }
  func.func @transform_3(%arg0: i32) -> (i32, i32) {
    %c0_i32 = arith.constant 0 : i32
    %c0_i32_0 = arith.constant 0 : i32
    %c0_i32_1 = arith.constant 0 : i32
    return %c0_i32, %c0_i32_0 : i32, i32
  }
  func.func @transform_4(%arg0: i32) -> (i32, i32) {
    %c0_i32 = arith.constant 0 : i32
    %c0_i32_0 = arith.constant 0 : i32
    return %arg0, %c0_i32 : i32, i32
  }
  func.func @transform_5(%arg0: i32) -> (i32, i32) {
    %c0_i32 = arith.constant 0 : i32
    %c0_i32_0 = arith.constant 0 : i32
    return %arg0, %c0_i32 : i32, i32
  }
  func.func @transform_6(%arg0: i32) -> (i32, i32) {
    %c0_i32 = arith.constant 0 : i32
    %c0_i32_0 = arith.constant 0 : i32
    return %arg0, %c0_i32 : i32, i32
  }
}

</mosaic_0001>

<llo_original>
// kernel: tpu_custom_call.1
$region0: #{tpu_custom_call.1}
  #allocation0 [shape = 'u32[]', space=smem, size = 0x4, offset = 0x4, fixed_abs, tag = 'smem constant byte address 0x4 - core index']
  #allocation1 [shape = 'u32[144,128]{1,0:T(1,128)}', space=vmem, size = 0x12000, scoped, tag = 'internal scratch']
  %s0 = inlined_call_operand.vmem [shape: f32[1,256], index: 0, kind: input, shape index: {}]
  %s1 = inlined_call_operand.vmem [shape: f32[1,256], index: 1, kind: input, shape index: {}]
  %s2 = inlined_call_operand.vmem [shape: f32[1,256], index: 2, kind: input, shape index: {}]
  %s3 = inlined_call_operand.hbm [shape: f32[256,256], index: 3, kind: input, shape index: {}]
  %s4 = inlined_call_operand.vmem [shape: f32[32,15], index: 4, kind: input, shape index: {}]
  %s5 = inlined_call_operand.vmem [shape: f32[32,1], index: 5, kind: input, shape index: {}]
  %s6 = inlined_call_operand.hbm [shape: f32[32,256], index: 6, kind: output, shape index: {}]
  %s7 = sld [smem:[#allocation0]]
  $region38: #{tpu_custom_call.1} parent=0
    _
  %s9 = ssub.s32 1, %s7
  %s10 = scalar_select 0, %s9, %s7
  $region1: #{tpu_custom_call.1} parent=0
    #allocation2 [shape = 'u8[262144]{0}', space=vmem, size = 0x40000, scoped, tag = 'input window, operand 3, single buffered']
    #allocation3 [shape = 's32[1]{0}', space=sflag, size = 0x4, scoped, tag = 'scoped memory for tpu_custom_call.1']
    #allocation4 [shape = 's32[1]{0}', space=sflag, size = 0x4, scoped, tag = 'scoped memory for tpu_custom_call.1']
    #allocation5 [shape = 'u8[32768]{0}', space=vmem, size = 0x8000, scoped, tag = 'output window, operand 0, single buffered']
    %11 = vsyncpa [#allocation3], 0
    %12 = vsyncpa [#allocation4], 0
    // Predicated region
    $region2: #{tpu_custom_call.1} parent=1 // pred_check
      _
    $region3: #{tpu_custom_call.1} parent=1 // pred_check_branch
      %14 = sbr.rel (0) target = $region5
    $region4: #{tpu_custom_call.1} parent=1 // pred_region
      _
    $region5: #{tpu_custom_call.1} parent=1 // pred_fallthru
      _
    // Predicated region
    $region6: #{tpu_custom_call.1} parent=1 // pred_check
      _
    $region7: #{tpu_custom_call.1} parent=1 // pred_check_branch
      %16 = sbr.rel (0) target = $region9
    $region8: #{tpu_custom_call.1} parent=1 // pred_region
      _
    $region9: #{tpu_custom_call.1} parent=1 // pred_fallthru
      _
    // Predicated region
    $region10: #{tpu_custom_call.1} parent=1 // pred_check
      _
    $region11: #{tpu_custom_call.1} parent=1 // pred_check_branch
      %18 = sbr.rel (0) target = $region13
    $region12: #{tpu_custom_call.1} parent=1 // pred_region
      _
    $region13: #{tpu_custom_call.1} parent=1 // pred_fallthru
      _
    // Predicated region
    $region14: #{tpu_custom_call.1} parent=1 // pred_check
      _
    $region15: #{tpu_custom_call.1} parent=1 // pred_check_branch
      %20 = sbr.rel (0) target = $region17
    $region16: #{tpu_custom_call.1} parent=1 // pred_region
      %s22 = ssub.s32 8192, 8192
      %23 = vsyncadd [#allocation3], %s22
      %s24 = sshll.u32 [#allocation2], 4
      %s25 = int_to_ptr.vmem [resolvable:$true] %s24
      %30 = dma.hbm_to_vmem [thread:$0]  %s3, 8192, %s25, [#allocation3], 256, 256, 16
    $region17: #{tpu_custom_call.1} parent=1 // pred_fallthru
      _
    // Predicated region
    $region18: #{tpu_custom_call.1} parent=1 // pred_check
      _
    $region19: #{tpu_custom_call.1} parent=1 // pred_check_branch
      %32 = sbr.rel (0) target = $region21
    $region20: #{tpu_custom_call.1} parent=1 // pred_region
      _
    $region21: #{tpu_custom_call.1} parent=1 // pred_fallthru
      _
    // Predicated region
    $region22: #{tpu_custom_call.1} parent=1 // pred_check
      _
    $region23: #{tpu_custom_call.1} parent=1 // pred_check_branch
      %34 = sbr.rel (0) target = $region25
    $region24: #{tpu_custom_call.1} parent=1 // pred_region
      _
    $region25: #{tpu_custom_call.1} parent=1 // pred_fallthru
      _
    // Predicated region
    $region26: #{tpu_custom_call.1} parent=1 // pred_check
      _
    $region27: #{tpu_custom_call.1} parent=1 // pred_check_branch
      %36 = sbr.rel (0) target = $region29
    $region28: #{tpu_custom_call.1} parent=1 // pred_region
      %37 = dma.done [#allocation3], 8192
    $region29: #{tpu_custom_call.1} parent=1 // pred_fallthru
      _
    %v38 = vld [vmem:[%s4] sm:$0xff]
    %v39 = vld [vmem:[%s4 + $0x8] sm:$0xff]
    %v40 = vld [vmem:[%s4 + $0x10] sm:$0xff]
    %v41 = vld [vmem:[%s4 + $0x18] sm:$0xff]
    %v42 = vld [vmem:[%s5] sm:$0xff]
    %v43 = vld [vmem:[%s5 + $0x8] sm:$0xff]
    %v44 = vld [vmem:[%s5 + $0x10] sm:$0xff]
    %v45 = vld [vmem:[%s5 + $0x18] sm:$0xff]
    %v46 = vld [vmem:[%s0] sm:$0x3]
    %v48 = vlaneseq
    %v49 = vshrl.u32 %v48, 7
    %v50 = vsub.s32 0, %v49
    %v51 = vrot.slane %v46, %v50
    %v52 = vlaneseq
    %v53 = vshrl.u32 %v52, 7
    %v54 = vsub.s32 1, %v53
    %v55 = vrot.slane %v46, %v54
    %v58 = vmul.f32 %v38, %v38
    %v59 = vmul.f32 %v39, %v39
    %v60 = vmul.f32 %v40, %v40
    %v61 = vmul.f32 %v41, %v41
    %v62 = vrcp.pop %v58
    %v63 = vrcp.pop %v59
    %v64 = vrcp.pop %v60
    %v65 = vrcp.pop %v61
    %v66 = vmul.f32 %v62, 0.5
    %v67 = vmul.f32 %v63, 0.5
    %v68 = vmul.f32 %v64, 0.5
    %v69 = vmul.f32 %v65, 0.5
    %71 = vset.pattern.permute.xlu0 2
    %72 = vperm.xlu0 %71, %v38
    %v73 = vpop.permute.xlu0 %72
    %76 = vset.pattern.permute.xlu0 2
    %77 = vperm.xlu0 %76, %v39
    %v78 = vpop.permute.xlu0 %77
    %81 = vset.pattern.permute.xlu0 2
    %82 = vperm.xlu0 %81, %v40
    %v83 = vpop.permute.xlu0 %82
    %86 = vset.pattern.permute.xlu0 2
    %87 = vperm.xlu0 %86, %v41
    %v88 = vpop.permute.xlu0 %87
    %v90 = vsub.f32 %v51, %v73
    %v91 = vsub.f32 %v55, %v73
    %v92 = vsub.f32 %v51, %v78
    %v93 = vsub.f32 %v55, %v78
    %v94 = vsub.f32 %v51, %v83
    %v95 = vsub.f32 %v55, %v83
    %v96 = vsub.f32 %v51, %v88
    %v97 = vsub.f32 %v55, %v88
    %v98 = vmul.f32 %v90, 0.15915494
    %v99 = vmul.f32 %v91, 0.15915494
    %v100 = vmul.f32 %v92, 0.15915494
    %v101 = vmul.f32 %v93, 0.15915494
    %v102 = vmul.f32 %v94, 0.15915494
    %v103 = vmul.f32 %v95, 0.15915494
    %v104 = vmul.f32 %v96, 0.15915494
    %v105 = vmul.f32 %v97, 0.15915494
    %vm106 = vcmp.lt.f32.partialorder %v98, 0.0
    %vm107 = vcmp.lt.f32.partialorder %v99, 0.0
    %vm108 = vcmp.lt.f32.partialorder %v100, 0.0
    %vm109 = vcmp.lt.f32.partialorder %v101, 0.0
    %vm110 = vcmp.lt.f32.partialorder %v102, 0.0
    %vm111 = vcmp.lt.f32.partialorder %v103, 0.0
    %vm112 = vcmp.lt.f32.partialorder %v104, 0.0
    %vm113 = vcmp.lt.f32.partialorder %v105, 0.0
    %v114 = vceil.f32 %v98
    %v115 = vceil.f32 %v99
    %v116 = vceil.f32 %v100
    %v117 = vceil.f32 %v101
    %v118 = vceil.f32 %v102
    %v119 = vceil.f32 %v103
    %v120 = vceil.f32 %v104
    %v121 = vceil.f32 %v105
    %v122 = vfloor.f32 %v98
    %v123 = vfloor.f32 %v99
    %v124 = vfloor.f32 %v100
    %v125 = vfloor.f32 %v101
    %v126 = vfloor.f32 %v102
    %v127 = vfloor.f32 %v103
    %v128 = vfloor.f32 %v104
    %v129 = vfloor.f32 %v105
    %v130 = vsel %vm106, %v114, %v122
    %v131 = vsel %vm107, %v115, %v123
    %v132 = vsel %vm108, %v116, %v124
    %v133 = vsel %vm109, %v117, %v125
    %v134 = vsel %vm110, %v118, %v126
    %v135 = vsel %vm111, %v119, %v127
    %v136 = vsel %vm112, %v120, %v128
    %v137 = vsel %vm113, %v121, %v129
    %v138 = vmul.f32 %v130, 6.2831855
    %v139 = vmul.f32 %v131, 6.2831855
    %v140 = vmul.f32 %v132, 6.2831855
    %v141 = vmul.f32 %v133, 6.2831855
    %v142 = vmul.f32 %v134, 6.2831855
    %v143 = vmul.f32 %v135, 6.2831855
    %v144 = vmul.f32 %v136, 6.2831855
    %v145 = vmul.f32 %v137, 6.2831855
    %v146 = vsub.f32 %v90, %v138
    %v147 = vsub.f32 %v91, %v139
    %v148 = vsub.f32 %v92, %v140
    %v149 = vsub.f32 %v93, %v141
    %v150 = vsub.f32 %v94, %v142
    %v151 = vsub.f32 %v95, %v143
    %v152 = vsub.f32 %v96, %v144
    %v153 = vsub.f32 %v97, %v145
    %154 = vset.pattern.permute.xlu0 0
    %155 = vperm.xlu0 %154, %v38
    %v156 = vpop.permute.xlu0 %155
    %158 = vset.pattern.permute.xlu0 0
    %159 = vperm.xlu0 %158, %v39
    %v160 = vpop.permute.xlu0 %159
    %162 = vset.pattern.permute.xlu0 0
    %163 = vperm.xlu0 %162, %v40
    %v164 = vpop.permute.xlu0 %163
    %166 = vset.pattern.permute.xlu0 0
    %167 = vperm.xlu0 %166, %v41
    %v168 = vpop.permute.xlu0 %167
    %v170 = vmul.f32 %v156, %v146
    %v171 = vmul.f32 %v156, %v147
    %v172 = vmul.f32 %v160, %v148
    %v173 = vmul.f32 %v160, %v149
    %v174 = vmul.f32 %v164, %v150
    %v175 = vmul.f32 %v164, %v151
    %v176 = vmul.f32 %v168, %v152
    %v177 = vmul.f32 %v168, %v153
    %v178 = vmul.f32 %v146, %v146
    %v179 = vmul.f32 %v147, %v147
    %v180 = vmul.f32 %v148, %v148
    %v181 = vmul.f32 %v149, %v149
    %v182 = vmul.f32 %v150, %v150
    %v183 = vmul.f32 %v151, %v151
    %v184 = vmul.f32 %v152, %v152
    %v185 = vmul.f32 %v153, %v153
    %v186 = vsub.f32 0.0, %v178
    %v187 = vsub.f32 0.0, %v179
    %v188 = vsub.f32 0.0, %v180
    %v189 = vsub.f32 0.0, %v181
    %v190 = vsub.f32 0.0, %v182
    %v191 = vsub.f32 0.0, %v183
    %v192 = vsub.f32 0.0, %v184
    %v193 = vsub.f32 0.0, %v185
    %195 = vset.pattern.permute.xlu0 1
    %196 = vperm.xlu0 %195, %v66
    %v197 = vpop.permute.xlu0 %196
    %200 = vset.pattern.permute.xlu0 1
    %201 = vperm.xlu0 %200, %v67
    %v202 = vpop.permute.xlu0 %201
    %205 = vset.pattern.permute.xlu0 1
    %206 = vperm.xlu0 %205, %v68
    %v207 = vpop.permute.xlu0 %206
    %210 = vset.pattern.permute.xlu0 1
    %211 = vperm.xlu0 %210, %v69
    %v212 = vpop.permute.xlu0 %211
    %v214 = vmul.f32 %v186, %v197
    %v215 = vmul.f32 %v187, %v197
    %v216 = vmul.f32 %v188, %v202
    %v217 = vmul.f32 %v189, %v202
    %v218 = vmul.f32 %v190, %v207
    %v219 = vmul.f32 %v191, %v207
    %v220 = vmul.f32 %v192, %v212
    %v221 = vmul.f32 %v193, %v212
    %v222 = vmul.f32 %v214, 1.442695
    %v223 = vpow.pop %v222
    %v224 = vmul.f32 %v215, 1.442695
    %v225 = vpow.pop %v224
    %v226 = vmul.f32 %v216, 1.442695
    %v227 = vpow.pop %v226
    %v228 = vmul.f32 %v217, 1.442695
    %v229 = vpow.pop %v228
    %v230 = vmul.f32 %v218, 1.442695
    %v231 = vpow.pop %v230
    %v232 = vmul.f32 %v219, 1.442695
    %v233 = vpow.pop %v232
    %v234 = vmul.f32 %v220, 1.442695
    %v235 = vpow.pop %v234
    %v236 = vmul.f32 %v221, 1.442695
    %v237 = vpow.pop %v236
    %v238 = vmul.f32 %v170, %v223
    %v239 = vmul.f32 %v171, %v225
    %v240 = vmul.f32 %v172, %v227
    %v241 = vmul.f32 %v173, %v229
    %v242 = vmul.f32 %v174, %v231
    %v243 = vmul.f32 %v175, %v233
    %v244 = vmul.f32 %v176, %v235
    %v245 = vmul.f32 %v177, %v237
    %v246 = vadd.f32 %v238, 0.0
    %v247 = vadd.f32 %v239, 0.0
    %v248 = vadd.f32 %v240, 0.0
    %v249 = vadd.f32 %v241, 0.0
    %v250 = vadd.f32 %v242, 0.0
    %v251 = vadd.f32 %v243, 0.0
    %v252 = vadd.f32 %v244, 0.0
    %v253 = vadd.f32 %v245, 0.0
    %254 = vset.pattern.permute.xlu0 5
    %255 = vperm.xlu0 %254, %v38
    %v256 = vpop.permute.xlu0 %255
    %258 = vset.pattern.permute.xlu0 5
    %259 = vperm.xlu0 %258, %v39
    %v260 = vpop.permute.xlu0 %259
    %262 = vset.pattern.permute.xlu0 5
    %263 = vperm.xlu0 %262, %v40
    %v264 = vpop.permute.xlu0 %263
    %266 = vset.pattern.permute.xlu0 5
    %267 = vperm.xlu0 %266, %v41
    %v268 = vpop.permute.xlu0 %267
    %v270 = vsub.f32 %v51, %v256
    %v271 = vsub.f32 %v55, %v256
    %v272 = vsub.f32 %v51, %v260
    %v273 = vsub.f32 %v55, %v260
    %v274 = vsub.f32 %v51, %v264
    %v275 = vsub.f32 %v55, %v264
    %v276 = vsub.f32 %v51, %v268
    %v277 = vsub.f32 %v55, %v268
    %v278 = vmul.f32 %v270, 0.15915494
    %v279 = vmul.f32 %v271, 0.15915494
    %v280 = vmul.f32 %v272, 0.15915494
    %v281 = vmul.f32 %v273, 0.15915494
    %v282 = vmul.f32 %v274, 0.15915494
    %v283 = vmul.f32 %v275, 0.15915494
    %v284 = vmul.f32 %v276, 0.15915494
    %v285 = vmul.f32 %v277, 0.15915494
    %vm286 = vcmp.lt.f32.partialorder %v278, 0.0
    %vm287 = vcmp.lt.f32.partialorder %v279, 0.0
    %vm288 = vcmp.lt.f32.partialorder %v280, 0.0
    %vm289 = vcmp.lt.f32.partialorder %v281, 0.0
    %vm290 = vcmp.lt.f32.partialorder %v282, 0.0
    %vm291 = vcmp.lt.f32.partialorder %v283, 0.0
    %vm292 = vcmp.lt.f32.partialorder %v284, 0.0
    %vm293 = vcmp.lt.f32.partialorder %v285, 0.0
    %v294 = vceil.f32 %v278
    %v295 = vceil.f32 %v279
    %v296 = vceil.f32 %v280
    %v297 = vceil.f32 %v281
    %v298 = vceil.f32 %v282
    %v299 = vceil.f32 %v283
    %v300 = vceil.f32 %v284
    %v301 = vceil.f32 %v285
    %v302 = vfloor.f32 %v278
    %v303 = vfloor.f32 %v279
    %v304 = vfloor.f32 %v280
    %v305 = vfloor.f32 %v281
    %v306 = vfloor.f32 %v282
    %v307 = vfloor.f32 %v283
    %v308 = vfloor.f32 %v284
    %v309 = vfloor.f32 %v285
    %v310 = vsel %vm286, %v294, %v302
    %v311 = vsel %vm287, %v295, %v303
    %v312 = vsel %vm288, %v296, %v304
    %v313 = vsel %vm289, %v297, %v305
    %v314 = vsel %vm290, %v298, %v306
    %v315 = vsel %vm291, %v299, %v307
    %v316 = vsel %vm292, %v300, %v308
    %v317 = vsel %vm293, %v301, %v309
    %v318 = vmul.f32 %v310, 6.2831855
    %v319 = vmul.f32 %v311, 6.2831855
    %v320 = vmul.f32 %v312, 6.2831855
    %v321 = vmul.f32 %v313, 6.2831855
    %v322 = vmul.f32 %v314, 6.2831855
    %v323 = vmul.f32 %v315, 6.2831855
    %v324 = vmul.f32 %v316, 6.2831855
    %v325 = vmul.f32 %v317, 6.2831855
    %v326 = vsub.f32 %v270, %v318
    %v327 = vsub.f32 %v271, %v319
    %v328 = vsub.f32 %v272, %v320
    %v329 = vsub.f32 %v273, %v321
    %v330 = vsub.f32 %v274, %v322
    %v331 = vsub.f32 %v275, %v323
    %v332 = vsub.f32 %v276, %v324
    %v333 = vsub.f32 %v277, %v325
    %334 = vset.pattern.permute.xlu0 3
    %335 = vperm.xlu0 %334, %v38
    %v336 = vpop.permute.xlu0 %335
    %338 = vset.pattern.permute.xlu0 3
    %339 = vperm.xlu0 %338, %v39
    %v340 = vpop.permute.xlu0 %339
    %342 = vset.pattern.permute.xlu0 3
    %343 = vperm.xlu0 %342, %v40
    %v344 = vpop.permute.xlu0 %343
    %346 = vset.pattern.permute.xlu0 3
    %347 = vperm.xlu0 %346, %v41
    %v348 = vpop.permute.xlu0 %347
    %v350 = vmul.f32 %v336, %v326
    %v351 = vmul.f32 %v336, %v327
    %v352 = vmul.f32 %v340, %v328
    %v353 = vmul.f32 %v340, %v329
    %v354 = vmul.f32 %v344, %v330
    %v355 = vmul.f32 %v344, %v331
    %v356 = vmul.f32 %v348, %v332
    %v357 = vmul.f32 %v348, %v333
    %v358 = vmul.f32 %v326, %v326
    %v359 = vmul.f32 %v327, %v327
    %v360 = vmul.f32 %v328, %v328
    %v361 = vmul.f32 %v329, %v329
    %v362 = vmul.f32 %v330, %v330
    %v363 = vmul.f32 %v331, %v331
    %v364 = vmul.f32 %v332, %v332
    %v365 = vmul.f32 %v333, %v333
    %v366 = vsub.f32 0.0, %v358
    %v367 = vsub.f32 0.0, %v359
    %v368 = vsub.f32 0.0, %v360
    %v369 = vsub.f32 0.0, %v361
    %v370 = vsub.f32 0.0, %v362
    %v371 = vsub.f32 0.0, %v363
    %v372 = vsub.f32 0.0, %v364
    %v373 = vsub.f32 0.0, %v365
    %374 = vset.pattern.permute.xlu0 4
    %375 = vperm.xlu0 %374, %v66
    %v376 = vpop.permute.xlu0 %375
    %378 = vset.pattern.permute.xlu0 4
    %379 = vperm.xlu0 %378, %v67
    %v380 = vpop.permute.xlu0 %379
    %382 = vset.pattern.permute.xlu0 4
    %383 = vperm.xlu0 %382, %v68
    %v384 = vpop.permute.xlu0 %383
    %386 = vset.pattern.permute.xlu0 4
    %387 = vperm.xlu0 %386, %v69
    %v388 = vpop.permute.xlu0 %387
    %v390 = vmul.f32 %v366, %v376
    %v391 = vmul.f32 %v367, %v376
    %v392 = vmul.f32 %v368, %v380
    %v393 = vmul.f32 %v369, %v380
    %v394 = vmul.f32 %v370, %v384
    %v395 = vmul.f32 %v371, %v384
    %v396 = vmul.f32 %v372, %v388
    %v397 = vmul.f32 %v373, %v388
    %v398 = vmul.f32 %v390, 1.442695
    %v399 = vpow.pop %v398
    %v400 = vmul.f32 %v391, 1.442695
    %v401 = vpow.pop %v400
    %v402 = vmul.f32 %v392, 1.442695
    %v403 = vpow.pop %v402
    %v404 = vmul.f32 %v393, 1.442695
    %v405 = vpow.pop %v404
    %v406 = vmul.f32 %v394, 1.442695
    %v407 = vpow.pop %v406
    %v408 = vmul.f32 %v395, 1.442695
    %v409 = vpow.pop %v408
    %v410 = vmul.f32 %v396, 1.442695
    %v411 = vpow.pop %v410
    %v412 = vmul.f32 %v397, 1.442695
    %v413 = vpow.pop %v412
    %v414 = vmul.f32 %v350, %v399
    %v415 = vmul.f32 %v351, %v401
    %v416 = vmul.f32 %v352, %v403
    %v417 = vmul.f32 %v353, %v405
    %v418 = vmul.f32 %v354, %v407
    %v419 = vmul.f32 %v355, %v409
    %v420 = vmul.f32 %v356, %v411
    %v421 = vmul.f32 %v357, %v413
    %v422 = vadd.f32 %v246, %v414
    %v423 = vadd.f32 %v247, %v415
    %v424 = vadd.f32 %v248, %v416
    %v425 = vadd.f32 %v249, %v417
    %v426 = vadd.f32 %v250, %v418
    %v427 = vadd.f32 %v251, %v419
    %v428 = vadd.f32 %v252, %v420
    %v429 = vadd.f32 %v253, %v421
    %430 = vset.pattern.permute.xlu0 8
    %431 = vperm.xlu0 %430, %v38
    %v432 = vpop.permute.xlu0 %431
    %434 = vset.pattern.permute.xlu0 8
    %435 = vperm.xlu0 %434, %v39
    %v436 = vpop.permute.xlu0 %435
    %438 = vset.pattern.permute.xlu0 8
    %439 = vperm.xlu0 %438, %v40
    %v440 = vpop.permute.xlu0 %439
    %442 = vset.pattern.permute.xlu0 8
    %443 = vperm.xlu0 %442, %v41
    %v444 = vpop.permute.xlu0 %443
    %v446 = vsub.f32 %v51, %v432
    %v447 = vsub.f32 %v55, %v432
    %v448 = vsub.f32 %v51, %v436
    %v449 = vsub.f32 %v55, %v436
    %v450 = vsub.f32 %v51, %v440
    %v451 = vsub.f32 %v55, %v440
    %v452 = vsub.f32 %v51, %v444
    %v453 = vsub.f32 %v55, %v444
    %v454 = vmul.f32 %v446, 0.15915494
    %v455 = vmul.f32 %v447, 0.15915494
    %v456 = vmul.f32 %v448, 0.15915494
    %v457 = vmul.f32 %v449, 0.15915494
    %v458 = vmul.f32 %v450, 0.15915494
    %v459 = vmul.f32 %v451, 0.15915494
    %v460 = vmul.f32 %v452, 0.15915494
    %v461 = vmul.f32 %v453, 0.15915494
    %vm462 = vcmp.lt.f32.partialorder %v454, 0.0
    %vm463 = vcmp.lt.f32.partialorder %v455, 0.0
    %vm464 = vcmp.lt.f32.partialorder %v456, 0.0
    %vm465 = vcmp.lt.f32.partialorder %v457, 0.0
    %vm466 = vcmp.lt.f32.partialorder %v458, 0.0
    %vm467 = vcmp.lt.f32.partialorder %v459, 0.0
    %vm468 = vcmp.lt.f32.partialorder %v460, 0.0
    %vm469 = vcmp.lt.f32.partialorder %v461, 0.0
    %v470 = vceil.f32 %v454
    %v471 = vceil.f32 %v455
    %v472 = vceil.f32 %v456
    %v473 = vceil.f32 %v457
    %v474 = vceil.f32 %v458
    %v475 = vceil.f32 %v459
    %v476 = vceil.f32 %v460
    %v477 = vceil.f32 %v461
    %v478 = vfloor.f32 %v454
    %v479 = vfloor.f32 %v455
    %v480 = vfloor.f32 %v456
    %v481 = vfloor.f32 %v457
    %v482 = vfloor.f32 %v458
    %v483 = vfloor.f32 %v459
    %v484 = vfloor.f32 %v460
    %v485 = vfloor.f32 %v461
    %v486 = vsel %vm462, %v470, %v478
    %v487 = vsel %vm463, %v471, %v479
    %v488 = vsel %vm464, %v472, %v480
    %v489 = vsel %vm465, %v473, %v481
    %v490 = vsel %vm466, %v474, %v482
    %v491 = vsel %vm467, %v475, %v483
    %v492 = vsel %vm468, %v476, %v484
    %v493 = vsel %vm469, %v477, %v485
    %v494 = vmul.f32 %v486, 6.2831855
    %v495 = vmul.f32 %v487, 6.2831855
    %v496 = vmul.f32 %v488, 6.2831855
    %v497 = vmul.f32 %v489, 6.2831855
    %v498 = vmul.f32 %v490, 6.2831855
    %v499 = vmul.f32 %v491, 6.2831855
    %v500 = vmul.f32 %v492, 6.2831855
    %v501 = vmul.f32 %v493, 6.2831855
    %v502 = vsub.f32 %v446, %v494
    %v503 = vsub.f32 %v447, %v495
    %v504 = vsub.f32 %v448, %v496
    %v505 = vsub.f32 %v449, %v497
    %v506 = vsub.f32 %v450, %v498
    %v507 = vsub.f32 %v451, %v499
    %v508 = vsub.f32 %v452, %v500
    %v509 = vsub.f32 %v453, %v501
    %510 = vset.pattern.permute.xlu0 6
    %511 = vperm.xlu0 %510, %v38
    %v512 = vpop.permute.xlu0 %511
    %514 = vset.pattern.permute.xlu0 6
    %515 = vperm.xlu0 %514, %v39
    %v516 = vpop.permute.xlu0 %515
    %518 = vset.pattern.permute.xlu0 6
    %519 = vperm.xlu0 %518, %v40
    %v520 = vpop.permute.xlu0 %519
    %522 = vset.pattern.permute.xlu0 6
    %523 = vperm.xlu0 %522, %v41
    %v524 = vpop.permute.xlu0 %523
    %v526 = vmul.f32 %v512, %v502
    %v527 = vmul.f32 %v512, %v503
    %v528 = vmul.f32 %v516, %v504
    %v529 = vmul.f32 %v516, %v505
    %v530 = vmul.f32 %v520, %v506
    %v531 = vmul.f32 %v520, %v507
    %v532 = vmul.f32 %v524, %v508
    %v533 = vmul.f32 %v524, %v509
    %v534 = vmul.f32 %v502, %v502
    %v535 = vmul.f32 %v503, %v503
    %v536 = vmul.f32 %v504, %v504
    %v537 = vmul.f32 %v505, %v505
    %v538 = vmul.f32 %v506, %v506
    %v539 = vmul.f32 %v507, %v507
    %v540 = vmul.f32 %v508, %v508
    %v541 = vmul.f32 %v509, %v509
    %v542 = vsub.f32 0.0, %v534
    %v543 = vsub.f32 0.0, %v535
    %v544 = vsub.f32 0.0, %v536
    %v545 = vsub.f32 0.0, %v537
    %v546 = vsub.f32 0.0, %v538
    %v547 = vsub.f32 0.0, %v539
    %v548 = vsub.f32 0.0, %v540
    %v549 = vsub.f32 0.0, %v541
    %550 = vset.pattern.permute.xlu0 7
    %551 = vperm.xlu0 %550, %v66
    %v552 = vpop.permute.xlu0 %551
    %554 = vset.pattern.permute.xlu0 7
    %555 = vperm.xlu0 %554, %v67
    %v556 = vpop.permute.xlu0 %555
    %558 = vset.pattern.permute.xlu0 7
    %559 = vperm.xlu0 %558, %v68
    %v560 = vpop.permute.xlu0 %559
    %562 = vset.pattern.permute.xlu0 7
    %563 = vperm.xlu0 %562, %v69
    %v564 = vpop.permute.xlu0 %563
    %v566 = vmul.f32 %v542, %v552
    %v567 = vmul.f32 %v543, %v552
    %v568 = vmul.f32 %v544, %v556
    %v569 = vmul.f32 %v545, %v556
    %v570 = vmul.f32 %v546, %v560
    %v571 = vmul.f32 %v547, %v560
    %v572 = vmul.f32 %v548, %v564
    %v573 = vmul.f32 %v549, %v564
    %v574 = vmul.f32 %v566, 1.442695
    %v575 = vpow.pop %v574
    %v576 = vmul.f32 %v567, 1.442695
    %v577 = vpow.pop %v576
    %v578 = vmul.f32 %v568, 1.442695
    %v579 = vpow.pop %v578
    %v580 = vmul.f32 %v569, 1.442695
    %v581 = vpow.pop %v580
    %v582 = vmul.f32 %v570, 1.442695
    %v583 = vpow.pop %v582
    %v584 = vmul.f32 %v571, 1.442695
    %v585 = vpow.pop %v584
    %v586 = vmul.f32 %v572, 1.442695
    %v587 = vpow.pop %v586
    %v588 = vmul.f32 %v573, 1.442695
    %v589 = vpow.pop %v588
    %v590 = vmul.f32 %v526, %v575
    %v591 = vmul.f32 %v527, %v577
    %v592 = vmul.f32 %v528, %v579
    %v593 = vmul.f32 %v529, %v581
    %v594 = vmul.f32 %v530, %v583
    %v595 = vmul.f32 %v531, %v585
    %v596 = vmul.f32 %v532, %v587
    %v597 = vmul.f32 %v533, %v589
    %v598 = vadd.f32 %v422, %v590
    %v599 = vadd.f32 %v423, %v591
    %v600 = vadd.f32 %v424, %v592
    %v601 = vadd.f32 %v425, %v593
    %v602 = vadd.f32 %v426, %v594
    %v603 = vadd.f32 %v427, %v595
    %v604 = vadd.f32 %v428, %v596
    %v605 = vadd.f32 %v429, %v597
    %606 = vset.pattern.permute.xlu0 11
    %607 = vperm.xlu0 %606, %v38
    %v608 = vpop.permute.xlu0 %607
    %610 = vset.pattern.permute.xlu0 11
    %611 = vperm.xlu0 %610, %v39
    %v612 = vpop.permute.xlu0 %611
    %614 = vset.pattern.permute.xlu0 11
    %615 = vperm.xlu0 %614, %v40
    %v616 = vpop.permute.xlu0 %615
    %618 = vset.pattern.permute.xlu0 11
    %619 = vperm.xlu0 %618, %v41
    %v620 = vpop.permute.xlu0 %619
    %v622 = vsub.f32 %v51, %v608
    %v623 = vsub.f32 %v55, %v608
    %v624 = vsub.f32 %v51, %v612
    %v625 = vsub.f32 %v55, %v612
    %v626 = vsub.f32 %v51, %v616
    %v627 = vsub.f32 %v55, %v616
    %v628 = vsub.f32 %v51, %v620
    %v629 = vsub.f32 %v55, %v620
    %v630 = vmul.f32 %v622, 0.15915494
    %v631 = vmul.f32 %v623, 0.15915494
    %v632 = vmul.f32 %v624, 0.15915494
    %v633 = vmul.f32 %v625, 0.15915494
    %v634 = vmul.f32 %v626, 0.15915494
    %v635 = vmul.f32 %v627, 0.15915494
    %v636 = vmul.f32 %v628, 0.15915494
    %v637 = vmul.f32 %v629, 0.15915494
    %vm638 = vcmp.lt.f32.partialorder %v630, 0.0
    %vm639 = vcmp.lt.f32.partialorder %v631, 0.0
    %vm640 = vcmp.lt.f32.partialorder %v632, 0.0
    %vm641 = vcmp.lt.f32.partialorder %v633, 0.0
    %vm642 = vcmp.lt.f32.partialorder %v634, 0.0
    %vm643 = vcmp.lt.f32.partialorder %v635, 0.0
    %vm644 = vcmp.lt.f32.partialorder %v636, 0.0
    %vm645 = vcmp.lt.f32.partialorder %v637, 0.0
    %v646 = vceil.f32 %v630
    %v647 = vceil.f32 %v631
    %v648 = vceil.f32 %v632
    %v649 = vceil.f32 %v633
    %v650 = vceil.f32 %v634
    %v651 = vceil.f32 %v635
    %v652 = vceil.f32 %v636
    %v653 = vceil.f32 %v637
    %v654 = vfloor.f32 %v630
    %v655 = vfloor.f32 %v631
    %v656 = vfloor.f32 %v632
    %v657 = vfloor.f32 %v633
    %v658 = vfloor.f32 %v634
    %v659 = vfloor.f32 %v635
    %v660 = vfloor.f32 %v636
    %v661 = vfloor.f32 %v637
    %v662 = vsel %vm638, %v646, %v654
    %v663 = vsel %vm639, %v647, %v655
    %v664 = vsel %vm640, %v648, %v656
    %v665 = vsel %vm641, %v649, %v657
    %v666 = vsel %vm642, %v650, %v658
    %v667 = vsel %vm643, %v651, %v659
    %v668 = vsel %vm644, %v652, %v660
    %v669 = vsel %vm645, %v653, %v661
    %v670 = vmul.f32 %v662, 6.2831855
    %v671 = vmul.f32 %v663, 6.2831855
    %v672 = vmul.f32 %v664, 6.2831855
    %v673 = vmul.f32 %v665, 6.2831855
    %v674 = vmul.f32 %v666, 6.2831855
    %v675 = vmul.f32 %v667, 6.2831855
    %v676 = vmul.f32 %v668, 6.2831855
    %v677 = vmul.f32 %v669, 6.2831855
    %v678 = vsub.f32 %v622, %v670
    %v679 = vsub.f32 %v623, %v671
    %v680 = vsub.f32 %v624, %v672
    %v681 = vsub.f32 %v625, %v673
    %v682 = vsub.f32 %v626, %v674
    %v683 = vsub.f32 %v627, %v675
    %v684 = vsub.f32 %v628, %v676
    %v685 = vsub.f32 %v629, %v677
    %686 = vset.pattern.permute.xlu0 9
    %687 = vperm.xlu0 %686, %v38
    %v688 = vpop.permute.xlu0 %687
    %690 = vset.pattern.permute.xlu0 9
    %691 = vperm.xlu0 %690, %v39
    %v692 = vpop.permute.xlu0 %691
    %694 = vset.pattern.permute.xlu0 9
    %695 = vperm.xlu0 %694, %v40
    %v696 = vpop.permute.xlu0 %695
    %698 = vset.pattern.permute.xlu0 9
    %699 = vperm.xlu0 %698, %v41
    %v700 = vpop.permute.xlu0 %699
    %v702 = vmul.f32 %v688, %v678
    %v703 = vmul.f32 %v688, %v679
    %v704 = vmul.f32 %v692, %v680
    %v705 = vmul.f32 %v692, %v681
    %v706 = vmul.f32 %v696, %v682
    %v707 = vmul.f32 %v696, %v683
    %v708 = vmul.f32 %v700, %v684
    %v709 = vmul.f32 %v700, %v685
    %v710 = vmul.f32 %v678, %v678
    %v711 = vmul.f32 %v679, %v679
    %v712 = vmul.f32 %v680, %v680
    %v713 = vmul.f32 %v681, %v681
    %v714 = vmul.f32 %v682, %v682
    %v715 = vmul.f32 %v683, %v683
    %v716 = vmul.f32 %v684, %v684
    %v717 = vmul.f32 %v685, %v685
    %v718 = vsub.f32 0.0, %v710
    %v719 = vsub.f32 0.0, %v711
    %v720 = vsub.f32 0.0, %v712
    %v721 = vsub.f32 0.0, %v713
    %v722 = vsub.f32 0.0, %v714
    %v723 = vsub.f32 0.0, %v715
    %v724 = vsub.f32 0.0, %v716
    %v725 = vsub.f32 0.0, %v717
    %726 = vset.pattern.permute.xlu0 10
    %727 = vperm.xlu0 %726, %v66
    %v728 = vpop.permute.xlu0 %727
    %730 = vset.pattern.permute.xlu0 10
    %731 = vperm.xlu0 %730, %v67
    %v732 = vpop.permute.xlu0 %731
    %734 = vset.pattern.permute.xlu0 10
    %735 = vperm.xlu0 %734, %v68
    %v736 = vpop.permute.xlu0 %735
    %738 = vset.pattern.permute.xlu0 10
    %739 = vperm.xlu0 %738, %v69
    %v740 = vpop.permute.xlu0 %739
    %v742 = vmul.f32 %v718, %v728
    %v743 = vmul.f32 %v719, %v728
    %v744 = vmul.f32 %v720, %v732
    %v745 = vmul.f32 %v721, %v732
    %v746 = vmul.f32 %v722, %v736
    %v747 = vmul.f32 %v723, %v736
    %v748 = vmul.f32 %v724, %v740
    %v749 = vmul.f32 %v725, %v740
    %v750 = vmul.f32 %v742, 1.442695
    %v751 = vpow.pop %v750
    %v752 = vmul.f32 %v743, 1.442695
    %v753 = vpow.pop %v752
    %v754 = vmul.f32 %v744, 1.442695
    %v755 = vpow.pop %v754
    %v756 = vmul.f32 %v745, 1.442695
    %v757 = vpow.pop %v756
    %v758 = vmul.f32 %v746, 1.442695
    %v759 = vpow.pop %v758
    %v760 = vmul.f32 %v747, 1.442695
    %v761 = vpow.pop %v760
    %v762 = vmul.f32 %v748, 1.442695
    %v763 = vpow.pop %v762
    %v764 = vmul.f32 %v749, 1.442695
    %v765 = vpow.pop %v764
    %v766 = vmul.f32 %v702, %v751
    %v767 = vmul.f32 %v703, %v753
    %v768 = vmul.f32 %v704, %v755
    %v769 = vmul.f32 %v705, %v757
    %v770 = vmul.f32 %v706, %v759
    %v771 = vmul.f32 %v707, %v761
    %v772 = vmul.f32 %v708, %v763
    %v773 = vmul.f32 %v709, %v765
    %v774 = vadd.f32 %v598, %v766
    %v775 = vadd.f32 %v599, %v767
    %v776 = vadd.f32 %v600, %v768
    %v777 = vadd.f32 %v601, %v769
    %v778 = vadd.f32 %v602, %v770
    %v779 = vadd.f32 %v603, %v771
    %v780 = vadd.f32 %v604, %v772
    %v781 = vadd.f32 %v605, %v773
    %782 = vset.pattern.permute.xlu0 14
    %783 = vperm.xlu0 %782, %v38
    %v784 = vpop.permute.xlu0 %783
    %786 = vset.pattern.permute.xlu0 14
    %787 = vperm.xlu0 %786, %v39
    %v788 = vpop.permute.xlu0 %787
    %790 = vset.pattern.permute.xlu0 14
    %791 = vperm.xlu0 %790, %v40
    %v792 = vpop.permute.xlu0 %791
    %794 = vset.pattern.permute.xlu0 14
    %795 = vperm.xlu0 %794, %v41
    %v796 = vpop.permute.xlu0 %795
    %v798 = vsub.f32 %v51, %v784
    %v799 = vsub.f32 %v55, %v784
    %v800 = vsub.f32 %v51, %v788
    %v801 = vsub.f32 %v55, %v788
    %v802 = vsub.f32 %v51, %v792
    %v803 = vsub.f32 %v55, %v792
    %v804 = vsub.f32 %v51, %v796
    %v805 = vsub.f32 %v55, %v796
    %v806 = vmul.f32 %v798, 0.15915494
    %v807 = vmul.f32 %v799, 0.15915494
    %v808 = vmul.f32 %v800, 0.15915494
    %v809 = vmul.f32 %v801, 0.15915494
    %v810 = vmul.f32 %v802, 0.15915494
    %v811 = vmul.f32 %v803, 0.15915494
    %v812 = vmul.f32 %v804, 0.15915494
    %v813 = vmul.f32 %v805, 0.15915494
    %vm814 = vcmp.lt.f32.partialorder %v806, 0.0
    %vm815 = vcmp.lt.f32.partialorder %v807, 0.0
    %vm816 = vcmp.lt.f32.partialorder %v808, 0.0
    %vm817 = vcmp.lt.f32.partialorder %v809, 0.0
    %vm818 = vcmp.lt.f32.partialorder %v810, 0.0
    %vm819 = vcmp.lt.f32.partialorder %v811, 0.0
    %vm820 = vcmp.lt.f32.partialorder %v812, 0.0
    %vm821 = vcmp.lt.f32.partialorder %v813, 0.0
    %v822 = vceil.f32 %v806
    %v823 = vceil.f32 %v807
    %v824 = vceil.f32 %v808
    %v825 = vceil.f32 %v809
    %v826 = vceil.f32 %v810
    %v827 = vceil.f32 %v811
    %v828 = vceil.f32 %v812
    %v829 = vceil.f32 %v813
    %v830 = vfloor.f32 %v806
    %v831 = vfloor.f32 %v807
    %v832 = vfloor.f32 %v808
    %v833 = vfloor.f32 %v809
    %v834 = vfloor.f32 %v810
    %v835 = vfloor.f32 %v811
    %v836 = vfloor.f32 %v812
    %v837 = vfloor.f32 %v813
    %v838 = vsel %vm814, %v822, %v830
    %v839 = vsel %vm815, %v823, %v831
    %v840 = vsel %vm816, %v824, %v832
    %v841 = vsel %vm817, %v825, %v833
    %v842 = vsel %vm818, %v826, %v834
    %v843 = vsel %vm819, %v827, %v835
    %v844 = vsel %vm820, %v828, %v836
    %v845 = vsel %vm821, %v829, %v837
    %v846 = vmul.f32 %v838, 6.2831855
    %v847 = vmul.f32 %v839, 6.2831855
    %v848 = vmul.f32 %v840, 6.2831855
    %v849 = vmul.f32 %v841, 6.2831855
    %v850 = vmul.f32 %v842, 6.2831855
    %v851 = vmul.f32 %v843, 6.2831855
    %v852 = vmul.f32 %v844, 6.2831855
    %v853 = vmul.f32 %v845, 6.2831855
    %v854 = vsub.f32 %v798, %v846
    %v855 = vsub.f32 %v799, %v847
    %v856 = vsub.f32 %v800, %v848
    %v857 = vsub.f32 %v801, %v849
    %v858 = vsub.f32 %v802, %v850
    %v859 = vsub.f32 %v803, %v851
    %v860 = vsub.f32 %v804, %v852
    %v861 = vsub.f32 %v805, %v853
    %862 = vset.pattern.permute.xlu0 12
    %863 = vperm.xlu0 %862, %v38
    %v864 = vpop.permute.xlu0 %863
    %866 = vset.pattern.permute.xlu0 12
    %867 = vperm.xlu0 %866, %v39
    %v868 = vpop.permute.xlu0 %867
    %870 = vset.pattern.permute.xlu0 12
    %871 = vperm.xlu0 %870, %v40
    %v872 = vpop.permute.xlu0 %871
    %874 = vset.pattern.permute.xlu0 12
    %875 = vperm.xlu0 %874, %v41
    %v876 = vpop.permute.xlu0 %875
    %v878 = vmul.f32 %v864, %v854
    %v879 = vmul.f32 %v864, %v855
    %v880 = vmul.f32 %v868, %v856
    %v881 = vmul.f32 %v868, %v857
    %v882 = vmul.f32 %v872, %v858
    %v883 = vmul.f32 %v872, %v859
    %v884 = vmul.f32 %v876, %v860
    %v885 = vmul.f32 %v876, %v861
    %v886 = vmul.f32 %v854, %v854
    %v887 = vmul.f32 %v855, %v855
    %v888 = vmul.f32 %v856, %v856
    %v889 = vmul.f32 %v857, %v857
    %v890 = vmul.f32 %v858, %v858
    %v891 = vmul.f32 %v859, %v859
    %v892 = vmul.f32 %v860, %v860
    %v893 = vmul.f32 %v861, %v861
    %v894 = vsub.f32 0.0, %v886
    %v895 = vsub.f32 0.0, %v887
    %v896 = vsub.f32 0.0, %v888
    %v897 = vsub.f32 0.0, %v889
    %v898 = vsub.f32 0.0, %v890
    %v899 = vsub.f32 0.0, %v891
    %v900 = vsub.f32 0.0, %v892
    %v901 = vsub.f32 0.0, %v893
    %902 = vset.pattern.permute.xlu0 13
    %903 = vperm.xlu0 %902, %v66
    %v904 = vpop.permute.xlu0 %903
    %906 = vset.pattern.permute.xlu0 13
    %907 = vperm.xlu0 %906, %v67
    %v908 = vpop.permute.xlu0 %907
    %910 = vset.pattern.permute.xlu0 13
    %911 = vperm.xlu0 %910, %v68
    %v912 = vpop.permute.xlu0 %911
    %914 = vset.pattern.permute.xlu0 13
    %915 = vperm.xlu0 %914, %v69
    %v916 = vpop.permute.xlu0 %915
    %v918 = vmul.f32 %v894, %v904
    %v919 = vmul.f32 %v895, %v904
    %v920 = vmul.f32 %v896, %v908
    %v921 = vmul.f32 %v897, %v908
    %v922 = vmul.f32 %v898, %v912
    %v923 = vmul.f32 %v899, %v912
    %v924 = vmul.f32 %v900, %v916
    %v925 = vmul.f32 %v901, %v916
    %v926 = vmul.f32 %v918, 1.442695
    %v927 = vpow.pop %v926
    %v928 = vmul.f32 %v919, 1.442695
    %v929 = vpow.pop %v928
    %v930 = vmul.f32 %v920, 1.442695
    %v931 = vpow.pop %v930
    %v932 = vmul.f32 %v921, 1.442695
    %v933 = vpow.pop %v932
    %v934 = vmul.f32 %v922, 1.442695
    %v935 = vpow.pop %v934
    %v936 = vmul.f32 %v923, 1.442695
    %v937 = vpow.pop %v936
    %v938 = vmul.f32 %v924, 1.442695
    %v939 = vpow.pop %v938
    %v940 = vmul.f32 %v925, 1.442695
    %v941 = vpow.pop %v940
    %v942 = vmul.f32 %v878, %v927
    %v943 = vmul.f32 %v879, %v929
    %v944 = vmul.f32 %v880, %v931
    %v945 = vmul.f32 %v881, %v933
    %v946 = vmul.f32 %v882, %v935
    %v947 = vmul.f32 %v883, %v937
    %v948 = vmul.f32 %v884, %v939
    %v949 = vmul.f32 %v885, %v941
    %v950 = vadd.f32 %v774, %v942
    %v951 = vadd.f32 %v775, %v943
    %v952 = vadd.f32 %v776, %v944
    %v953 = vadd.f32 %v777, %v945
    %v954 = vadd.f32 %v778, %v946
    %v955 = vadd.f32 %v779, %v947
    %v956 = vadd.f32 %v780, %v948
    %v957 = vadd.f32 %v781, %v949
    %v958 = vld [vmem:[%s1] sm:$0x3]
    %v959 = vmul.f32 %v950, 0.0046296297
    %v960 = vmul.f32 %v951, 0.0046296297
    %v961 = vmul.f32 %v952, 0.0046296297
    %v962 = vmul.f32 %v953, 0.0046296297
    %v963 = vmul.f32 %v954, 0.0046296297
    %v964 = vmul.f32 %v955, 0.0046296297
    %v965 = vmul.f32 %v956, 0.0046296297
    %v966 = vmul.f32 %v957, 0.0046296297
    %v968 = vlaneseq
    %v969 = vshrl.u32 %v968, 7
    %v970 = vsub.s32 0, %v969
    %v971 = vrot.slane %v958, %v970
    %v972 = vlaneseq
    %v973 = vshrl.u32 %v972, 7
    %v974 = vsub.s32 1, %v973
    %v975 = vrot.slane %v958, %v974
    %v978 = vsub.f32 %v971, %v959
    %v979 = vsub.f32 %v975, %v960
    %v980 = vsub.f32 %v971, %v961
    %v981 = vsub.f32 %v975, %v962
    %v982 = vsub.f32 %v971, %v963
    %v983 = vsub.f32 %v975, %v964
    %v984 = vsub.f32 %v971, %v965
    %v985 = vsub.f32 %v975, %v966
    %v986 = vld [vmem:[#allocation2] sm:$0xff]
    %v987 = vld [vmem:[#allocation2 + $0x8] sm:$0xff]
    %v988 = vld [vmem:[#allocation2 + $0x10] sm:$0xff]
    %v989 = vld [vmem:[#allocation2 + $0x18] sm:$0xff]
    %v990 = vld [vmem:[#allocation2 + $0x20] sm:$0xff]
    %v991 = vld [vmem:[#allocation2 + $0x28] sm:$0xff]
    %v992 = vld [vmem:[#allocation2 + $0x30] sm:$0xff]
    %v993 = vld [vmem:[#allocation2 + $0x38] sm:$0xff]
    %v994 = vld [vmem:[#allocation2 + $0x40] sm:$0xff]
    %v995 = vld [vmem:[#allocation2 + $0x48] sm:$0xff]
    %v996 = vld [vmem:[#allocation2 + $0x50] sm:$0xff]
    %v997 = vld [vmem:[#allocation2 + $0x58] sm:$0xff]
    %v998 = vld [vmem:[#allocation2 + $0x60] sm:$0xff]
    %v999 = vld [vmem:[#allocation2 + $0x68] sm:$0xff]
    %v1000 = vld [vmem:[#allocation2 + $0x70] sm:$0xff]
    %v1001 = vld [vmem:[#allocation2 + $0x78] sm:$0xff]
    %v1002 = vld [vmem:[#allocation2 + $0x80] sm:$0xff]
    %v1003 = vld [vmem:[#allocation2 + $0x88] sm:$0xff]
    %v1004 = vld [vmem:[#allocation2 + $0x90] sm:$0xff]
    %v1005 = vld [vmem:[#allocation2 + $0x98] sm:$0xff]
    %v1006 = vld [vmem:[#allocation2 + $0xa0] sm:$0xff]
    %v1007 = vld [vmem:[#allocation2 + $0xa8] sm:$0xff]
    %v1008 = vld [vmem:[#allocation2 + $0xb0] sm:$0xff]
    %v1009 = vld [vmem:[#allocation2 + $0xb8] sm:$0xff]
    %v1010 = vld [vmem:[#allocation2 + $0xc0] sm:$0xff]
    %v1011 = vld [vmem:[#allocation2 + $0xc8] sm:$0xff]
    %v1012 = vld [vmem:[#allocation2 + $0xd0] sm:$0xff]
    %v1013 = vld [vmem:[#allocation2 + $0xd8] sm:$0xff]
    %v1014 = vld [vmem:[#allocation2 + $0xe0] sm:$0xff]
    %v1015 = vld [vmem:[#allocation2 + $0xe8] sm:$0xff]
    %v1016 = vld [vmem:[#allocation2 + $0xf0] sm:$0xff]
    %v1017 = vld [vmem:[#allocation2 + $0xf8] sm:$0xff]
    %v1018 = vld [vmem:[#allocation2 + $0x100] sm:$0xff]
    %v1019 = vld [vmem:[#allocation2 + $0x108] sm:$0xff]
    %v1020 = vld [vmem:[#allocation2 + $0x110] sm:$0xff]
    %v1021 = vld [vmem:[#allocation2 + $0x118] sm:$0xff]
    %v1022 = vld [vmem:[#allocation2 + $0x120] sm:$0xff]
    %v1023 = vld [vmem:[#allocation2 + $0x128] sm:$0xff]
    %v1024 = vld [vmem:[#allocation2 + $0x130] sm:$0xff]
    %v1025 = vld [vmem:[#allocation2 + $0x138] sm:$0xff]
    %v1026 = vld [vmem:[#allocation2 + $0x140] sm:$0xff]
    %v1027 = vld [vmem:[#allocation2 + $0x148] sm:$0xff]
    %v1028 = vld [vmem:[#allocation2 + $0x150] sm:$0xff]
    %v1029 = vld [vmem:[#allocation2 + $0x158] sm:$0xff]
    %v1030 = vld [vmem:[#allocation2 + $0x160] sm:$0xff]
    %v1031 = vld [vmem:[#allocation2 + $0x168] sm:$0xff]
    %v1032 = vld [vmem:[#allocation2 + $0x170] sm:$0xff]
    %v1033 = vld [vmem:[#allocation2 + $0x178] sm:$0xff]
    %v1034 = vld [vmem:[#allocation2 + $0x180] sm:$0xff]
    %v1035 = vld [vmem:[#allocation2 + $0x188] sm:$0xff]
    %v1036 = vld [vmem:[#allocation2 + $0x190] sm:$0xff]
    %v1037 = vld [vmem:[#allocation2 + $0x198] sm:$0xff]
    %v1038 = vld [vmem:[#allocation2 + $0x1a0] sm:$0xff]
    %v1039 = vld [vmem:[#allocation2 + $0x1a8] sm:$0xff]
    %v1040 = vld [vmem:[#allocation2 + $0x1b0] sm:$0xff]
    %v1041 = vld [vmem:[#allocation2 + $0x1b8] sm:$0xff]
    %v1042 = vld [vmem:[#allocation2 + $0x1c0] sm:$0xff]
    %v1043 = vld [vmem:[#allocation2 + $0x1c8] sm:$0xff]
    %v1044 = vld [vmem:[#allocation2 + $0x1d0] sm:$0xff]
    %v1045 = vld [vmem:[#allocation2 + $0x1d8] sm:$0xff]
    %v1046 = vld [vmem:[#allocation2 + $0x1e0] sm:$0xff]
    %v1047 = vld [vmem:[#allocation2 + $0x1e8] sm:$0xff]
    %v1048 = vld [vmem:[#allocation2 + $0x1f0] sm:$0xff]
    %v1049 = vld [vmem:[#allocation2 + $0x1f8] sm:$0xff]
    %v1050 = vld [vmem:[%s2] sm:$0x3]
    %1052 = vset.pattern.permute.xlu0 0
    %1053 = vperm.xlu0 %1052, %v42
    %v1054 = vpop.permute.xlu0 %1053
    %1057 = vset.pattern.permute.xlu0 0
    %1058 = vperm.xlu0 %1057, %v43
    %v1059 = vpop.permute.xlu0 %1058
    %1062 = vset.pattern.permute.xlu0 0
    %1063 = vperm.xlu0 %1062, %v44
    %v1064 = vpop.permute.xlu0 %1063
    %1067 = vset.pattern.permute.xlu0 0
    %1068 = vperm.xlu0 %1067, %v45
    %v1069 = vpop.permute.xlu0 %1068
    %v1072 = vlaneseq
    %v1073 = vshrl.u32 %v1072, 7
    %v1074 = vsub.s32 0, %v1073
    %v1075 = vrot.slane %v1050, %v1074
    %v1076 = vlaneseq
    %v1077 = vshrl.u32 %v1076, 7
    %v1078 = vsub.s32 1, %v1077
    %v1079 = vrot.slane %v1050, %v1078
    %v1082 = vmul.f32 %v1054, %v1075
    %v1083 = vmul.f32 %v1054, %v1079
    %v1084 = vmul.f32 %v1059, %v1075
    %v1085 = vmul.f32 %v1059, %v1079
    %v1086 = vmul.f32 %v1064, %v1075
    %v1087 = vmul.f32 %v1064, %v1079
    %v1088 = vmul.f32 %v1069, %v1075
    %v1089 = vmul.f32 %v1069, %v1079
    %v1090 = vand.u32 %v987, 4294901760
    %1091 = vmatprep.subr.mxu0 %v1090
    %v1092 = vand.u32 %v986, 4294901760
    %1093 = vmatpush1.msra.mxu0 %v1092
    %v1094 = vand.u32 %v989, 4294901760
    %1095 = vmatprep.subr.mxu0 %v1094
    %v1096 = vand.u32 %v988, 4294901760
    %1097 = vmatpush1.msra.mxu0 %v1096
    %v1098 = vand.u32 %v991, 4294901760
    %1099 = vmatprep.subr.mxu0 %v1098
    %v1100 = vand.u32 %v990, 4294901760
    %1101 = vmatpush1.msra.mxu0 %v1100
    %v1102 = vand.u32 %v993, 4294901760
    %1103 = vmatprep.subr.mxu0 %v1102
    %v1104 = vand.u32 %v992, 4294901760
    %1105 = vmatpush1.msra.mxu0 %v1104
    %v1106 = vand.u32 %v995, 4294901760
    %1107 = vmatprep.subr.mxu0 %v1106
    %v1108 = vand.u32 %v994, 4294901760
    %1109 = vmatpush1.msra.mxu0 %v1108
    %v1110 = vand.u32 %v997, 4294901760
    %1111 = vmatprep.subr.mxu0 %v1110
    %v1112 = vand.u32 %v996, 4294901760
    %1113 = vmatpush1.msra.mxu0 %v1112
    %v1114 = vand.u32 %v999, 4294901760
    %1115 = vmatprep.subr.mxu0 %v1114
    %v1116 = vand.u32 %v998, 4294901760
    %1117 = vmatpush1.msra.mxu0 %v1116
    %v1118 = vand.u32 %v1001, 4294901760
    %1119 = vmatprep.subr.mxu0 %v1118
    %v1120 = vand.u32 %v1000, 4294901760
    %1121 = vmatpush1.msra.mxu0 %v1120
    %v1122 = vand.u32 %v1003, 4294901760
    %1123 = vmatprep.subr.mxu0 %v1122
    %v1124 = vand.u32 %v1002, 4294901760
    %1125 = vmatpush1.msra.mxu0 %v1124
    %v1126 = vand.u32 %v1005, 4294901760
    %1127 = vmatprep.subr.mxu0 %v1126
    %v1128 = vand.u32 %v1004, 4294901760
    %1129 = vmatpush1.msra.mxu0 %v1128
    %v1130 = vand.u32 %v1007, 4294901760
    %1131 = vmatprep.subr.mxu0 %v1130
    %v1132 = vand.u32 %v1006, 4294901760
    %1133 = vmatpush1.msra.mxu0 %v1132
    %v1134 = vand.u32 %v1009, 4294901760
    %1135 = vmatprep.subr.mxu0 %v1134
    %v1136 = vand.u32 %v1008, 4294901760
    %1137 = vmatpush1.msra.mxu0 %v1136
    %v1138 = vand.u32 %v1011, 4294901760
    %1139 = vmatprep.subr.mxu0 %v1138
    %v1140 = vand.u32 %v1010, 4294901760
    %1141 = vmatpush1.msra.mxu0 %v1140
    %v1142 = vand.u32 %v1013, 4294901760
    %1143 = vmatprep.subr.mxu0 %v1142
    %v1144 = vand.u32 %v1012, 4294901760
    %1145 = vmatpush1.msra.mxu0 %v1144
    %v1146 = vand.u32 %v1015, 4294901760
    %1147 = vmatprep.subr.mxu0 %v1146
    %v1148 = vand.u32 %v1014, 4294901760
    %1149 = vmatpush1.msra.mxu0 %v1148
    %v1150 = vand.u32 %v1017, 4294901760
    %1151 = vmatprep.subr.mxu0 %v1150
    %v1152 = vand.u32 %v1016, 4294901760
    %1153 = vmatpush1.msra.mxu0 %v1152
    %v1154 = vand.u32 %v1019, 4294901760
    %1155 = vmatprep.subr.mxu0 %v1154
    %v1156 = vand.u32 %v1018, 4294901760
    %1157 = vmatpush1.msra.mxu0 %v1156
    %v1158 = vand.u32 %v1021, 4294901760
    %1159 = vmatprep.subr.mxu0 %v1158
    %v1160 = vand.u32 %v1020, 4294901760
    %1161 = vmatpush1.msra.mxu0 %v1160
    %v1162 = vand.u32 %v1023, 4294901760
    %1163 = vmatprep.subr.mxu0 %v1162
    %v1164 = vand.u32 %v1022, 4294901760
    %1165 = vmatpush1.msra.mxu0 %v1164
    %v1166 = vand.u32 %v1025, 4294901760
    %1167 = vmatprep.subr.mxu0 %v1166
    %v1168 = vand.u32 %v1024, 4294901760
    %1169 = vmatpush1.msra.mxu0 %v1168
    %v1170 = vand.u32 %v1027, 4294901760
    %1171 = vmatprep.subr.mxu0 %v1170
    %v1172 = vand.u32 %v1026, 4294901760
    %1173 = vmatpush1.msra.mxu0 %v1172
    %v1174 = vand.u32 %v1029, 4294901760
    %1175 = vmatprep.subr.mxu0 %v1174
    %v1176 = vand.u32 %v1028, 4294901760
    %1177 = vmatpush1.msra.mxu0 %v1176
    %v1178 = vand.u32 %v1031, 4294901760
    %1179 = vmatprep.subr.mxu0 %v1178
    %v1180 = vand.u32 %v1030, 4294901760
    %1181 = vmatpush1.msra.mxu0 %v1180
    %v1182 = vand.u32 %v1033, 4294901760
    %1183 = vmatprep.subr.mxu0 %v1182
    %v1184 = vand.u32 %v1032, 4294901760
    %1185 = vmatpush1.msra.mxu0 %v1184
    %v1186 = vand.u32 %v1035, 4294901760
    %1187 = vmatprep.subr.mxu0 %v1186
    %v1188 = vand.u32 %v1034, 4294901760
    %1189 = vmatpush1.msra.mxu0 %v1188
    %v1190 = vand.u32 %v1037, 4294901760
    %1191 = vmatprep.subr.mxu0 %v1190
    %v1192 = vand.u32 %v1036, 4294901760
    %1193 = vmatpush1.msra.mxu0 %v1192
    %v1194 = vand.u32 %v1039, 4294901760
    %1195 = vmatprep.subr.mxu0 %v1194
    %v1196 = vand.u32 %v1038, 4294901760
    %1197 = vmatpush1.msra.mxu0 %v1196
    %v1198 = vand.u32 %v1041, 4294901760
    %1199 = vmatprep.subr.mxu0 %v1198
    %v1200 = vand.u32 %v1040, 4294901760
    %1201 = vmatpush1.msra.mxu0 %v1200
    %v1202 = vand.u32 %v1043, 4294901760
    %1203 = vmatprep.subr.mxu0 %v1202
    %v1204 = vand.u32 %v1042, 4294901760
    %1205 = vmatpush1.msra.mxu0 %v1204
    %v1206 = vand.u32 %v1045, 4294901760
    %1207 = vmatprep.subr.mxu0 %v1206
    %v1208 = vand.u32 %v1044, 4294901760
    %1209 = vmatpush1.msra.mxu0 %v1208
    %v1210 = vand.u32 %v1047, 4294901760
    %1211 = vmatprep.subr.mxu0 %v1210
    %v1212 = vand.u32 %v1046, 4294901760
    %1213 = vmatpush1.msra.mxu0 %v1212
    %v1214 = vand.u32 %v1049, 4294901760
    %1215 = vmatprep.subr.mxu0 %v1214
    %v1216 = vand.u32 %v1048, 4294901760
    %1217 = vmatpush1.msra.mxu0 %v1216
    %v1218 = vand.u32 %v979, 4294901760
    %v1219 = vsub.f32 %v979, %v1218
    %v1220 = vand.u32 %v1219, 4294901760
    %v1221 = vsub.f32 %v1219, %v1220
    %v1222 = vand.u32 %v1221, 4294901760
    %1223 = vmatprep.mubr.f32.mxu0 %v1222
    %v1224 = vand.u32 %v978, 4294901760
    %v1225 = vsub.f32 %v978, %v1224
    %v1226 = vand.u32 %v1225, 4294901760
    %v1227 = vsub.f32 %v1225, %v1226
    %v1228 = vand.u32 %v1227, 4294901760
    %1229 = vmatmul.mubr.f32.gmra.mrb[0].mxu0 %v1228
    %v1230 = vpop.f32.mrb[0].mxu0
    %v1231 = vadd.f32 %v1082, %v1230
    %v1232 = vpop.f32.mrb[0].mxu0
    %v1233 = vadd.f32 %v1083, %v1232
    %v1234 = vand.u32 %v981, 4294901760
    %v1235 = vsub.f32 %v981, %v1234
    %v1236 = vand.u32 %v1235, 4294901760
    %v1237 = vsub.f32 %v1235, %v1236
    %v1238 = vand.u32 %v1237, 4294901760
    %1239 = vmatprep.mubr.f32.mxu0 %v1238
    %v1240 = vand.u32 %v980, 4294901760
    %v1241 = vsub.f32 %v980, %v1240
    %v1242 = vand.u32 %v1241, 4294901760
    %v1243 = vsub.f32 %v1241, %v1242
    %v1244 = vand.u32 %v1243, 4294901760
    %1245 = vmatmul.mubr.f32.gmra.mrb[0].mxu0 %v1244
    %v1246 = vpop.f32.mrb[0].mxu0
    %v1247 = vadd.f32 %v1084, %v1246
    %v1248 = vpop.f32.mrb[0].mxu0
    %v1249 = vadd.f32 %v1085, %v1248
    %v1250 = vand.u32 %v983, 4294901760
    %v1251 = vsub.f32 %v983, %v1250
    %v1252 = vand.u32 %v1251, 4294901760
    %v1253 = vsub.f32 %v1251, %v1252
    %v1254 = vand.u32 %v1253, 4294901760
    %1255 = vmatprep.mubr.f32.mxu0 %v1254
    %v1256 = vand.u32 %v982, 4294901760
    %v1257 = vsub.f32 %v982, %v1256
    %v1258 = vand.u32 %v1257, 4294901760
    %v1259 = vsub.f32 %v1257, %v1258
    %v1260 = vand.u32 %v1259, 4294901760
    %1261 = vmatmul.mubr.f32.gmra.mrb[0].mxu0 %v1260
    %v1262 = vpop.f32.mrb[0].mxu0
    %v1263 = vadd.f32 %v1086, %v1262
    %v1264 = vpop.f32.mrb[0].mxu0
    %v1265 = vadd.f32 %v1087, %v1264
    %v1266 = vand.u32 %v985, 4294901760
    %v1267 = vsub.f32 %v985, %v1266
    %v1268 = vand.u32 %v1267, 4294901760
    %v1269 = vsub.f32 %v1267, %v1268
    %v1270 = vand.u32 %v1269, 4294901760
    %1271 = vmatprep.mubr.f32.mxu0 %v1270
    %v1272 = vand.u32 %v984, 4294901760
    %v1273 = vsub.f32 %v984, %v1272
    %v1274 = vand.u32 %v1273, 4294901760
    %v1275 = vsub.f32 %v1273, %v1274
    %v1276 = vand.u32 %v1275, 4294901760
    %1277 = vmatmul.mubr.f32.gmra.mrb[0].mxu0 %v1276
    %v1278 = vpop.f32.mrb[0].mxu0
    %v1279 = vadd.f32 %v1088, %v1278
    %v1280 = vpop.f32.mrb[0].mxu0
    %v1281 = vadd.f32 %v1089, %v1280
    %1282 = vdwg.mxu0
    %v1283 = vand.u32 %v987, 4294901760
    %v1284 = vsub.f32 %v987, %v1283
    %v1285 = vand.u32 %v1284, 4294901760
    %v1286 = vsub.f32 %v1284, %v1285
    %v1287 = vand.u32 %v1286, 4294901760
    %1288 = vmatprep.subr.mxu0 %v1287
    %v1289 = vand.u32 %v986, 4294901760
    %v1290 = vsub.f32 %v986, %v1289
    %v1291 = vand.u32 %v1290, 4294901760
    %v1292 = vsub.f32 %v1290, %v1291
    %v1293 = vand.u32 %v1292, 4294901760
    %1294 = vmatpush1.msra.mxu0 %v1293
    %v1295 = vand.u32 %v989, 4294901760
    %v1296 = vsub.f32 %v989, %v1295
    %v1297 = vand.u32 %v1296, 4294901760
    %v1298 = vsub.f32 %v1296, %v1297
    %v1299 = vand.u32 %v1298, 4294901760
    %1300 = vmatprep.subr.mxu0 %v1299
    %v1301 = vand.u32 %v988, 4294901760
    %v1302 = vsub.f32 %v988, %v1301
    %v1303 = vand.u32 %v1302, 4294901760
    %v1304 = vsub.f32 %v1302, %v1303
    %v1305 = vand.u32 %v1304, 4294901760
    %1306 = vmatpush1.msra.mxu0 %v1305
    %v1307 = vand.u32 %v991, 4294901760
    %v1308 = vsub.f32 %v991, %v1307
    %v1309 = vand.u32 %v1308, 4294901760
    %v1310 = vsub.f32 %v1308, %v1309
    %v1311 = vand.u32 %v1310, 4294901760
    %1312 = vmatprep.subr.mxu0 %v1311
    %v1313 = vand.u32 %v990, 4294901760
    %v1314 = vsub.f32 %v990, %v1313
    %v1315 = vand.u32 %v1314, 4294901760
    %v1316 = vsub.f32 %v1314, %v1315
    %v1317 = vand.u32 %v1316, 4294901760
    %1318 = vmatpush1.msra.mxu0 %v1317
    %v1319 = vand.u32 %v993, 4294901760
    %v1320 = vsub.f32 %v993, %v1319
    %v1321 = vand.u32 %v1320, 4294901760
    %v1322 = vsub.f32 %v1320, %v1321
    %v1323 = vand.u32 %v1322, 4294901760
    %1324 = vmatprep.subr.mxu0 %v1323
    %v1325 = vand.u32 %v992, 4294901760
    %v1326 = vsub.f32 %v992, %v1325
    %v1327 = vand.u32 %v1326, 4294901760
    %v1328 = vsub.f32 %v1326, %v1327
    %v1329 = vand.u32 %v1328, 4294901760
    %1330 = vmatpush1.msra.mxu0 %v1329
    %v1331 = vand.u32 %v995, 4294901760
    %v1332 = vsub.f32 %v995, %v1331
    %v1333 = vand.u32 %v1332, 4294901760
    %v1334 = vsub.f32 %v1332, %v1333
    %v1335 = vand.u32 %v1334, 4294901760
    %1336 = vmatprep.subr.mxu0 %v1335
    %v1337 = vand.u32 %v994, 4294901760
    %v1338 = vsub.f32 %v994, %v1337
    %v1339 = vand.u32 %v1338, 4294901760
    %v1340 = vsub.f32 %v1338, %v1339
    %v1341 = vand.u32 %v1340, 4294901760
    %1342 = vmatpush1.msra.mxu0 %v1341
    %v1343 = vand.u32 %v997, 4294901760
    %v1344 = vsub.f32 %v997, %v1343
    %v1345 = vand.u32 %v1344, 4294901760
    %v1346 = vsub.f32 %v1344, %v1345
    %v1347 = vand.u32 %v1346, 4294901760
    %1348 = vmatprep.subr.mxu0 %v1347
    %v1349 = vand.u32 %v996, 4294901760
    %v1350 = vsub.f32 %v996, %v1349
    %v1351 = vand.u32 %v1350, 4294901760
    %v1352 = vsub.f32 %v1350, %v1351
    %v1353 = vand.u32 %v1352, 4294901760
    %1354 = vmatpush1.msra.mxu0 %v1353
    %v1355 = vand.u32 %v999, 4294901760
    %v1356 = vsub.f32 %v999, %v1355
    %v1357 = vand.u32 %v1356, 4294901760
    %v1358 = vsub.f32 %v1356, %v1357
    %v1359 = vand.u32 %v1358, 4294901760
    %1360 = vmatprep.subr.mxu0 %v1359
    %v1361 = vand.u32 %v998, 4294901760
    %v1362 = vsub.f32 %v998, %v1361
    %v1363 = vand.u32 %v1362, 4294901760
    %v1364 = vsub.f32 %v1362, %v1363
    %v1365 = vand.u32 %v1364, 4294901760
    %1366 = vmatpush1.msra.mxu0 %v1365
    %v1367 = vand.u32 %v1001, 4294901760
    %v1368 = vsub.f32 %v1001, %v1367
    %v1369 = vand.u32 %v1368, 4294901760
    %v1370 = vsub.f32 %v1368, %v1369
    %v1371 = vand.u32 %v1370, 4294901760
    %1372 = vmatprep.subr.mxu0 %v1371
    %v1373 = vand.u32 %v1000, 4294901760
    %v1374 = vsub.f32 %v1000, %v1373
    %v1375 = vand.u32 %v1374, 4294901760
    %v1376 = vsub.f32 %v1374, %v1375
    %v1377 = vand.u32 %v1376, 4294901760
    %1378 = vmatpush1.msra.mxu0 %v1377
    %v1379 = vand.u32 %v1003, 4294901760
    %v1380 = vsub.f32 %v1003, %v1379
    %v1381 = vand.u32 %v1380, 4294901760
    %v1382 = vsub.f32 %v1380, %v1381
    %v1383 = vand.u32 %v1382, 4294901760
    %1384 = vmatprep.subr.mxu0 %v1383
    %v1385 = vand.u32 %v1002, 4294901760
    %v1386 = vsub.f32 %v1002, %v1385
    %v1387 = vand.u32 %v1386, 4294901760
    %v1388 = vsub.f32 %v1386, %v1387
    %v1389 = vand.u32 %v1388, 4294901760
    %1390 = vmatpush1.msra.mxu0 %v1389
    %v1391 = vand.u32 %v1005, 4294901760
    %v1392 = vsub.f32 %v1005, %v1391
    %v1393 = vand.u32 %v1392, 4294901760
    %v1394 = vsub.f32 %v1392, %v1393
    %v1395 = vand.u32 %v1394, 4294901760
    %1396 = vmatprep.subr.mxu0 %v1395
    %v1397 = vand.u32 %v1004, 4294901760
    %v1398 = vsub.f32 %v1004, %v1397
    %v1399 = vand.u32 %v1398, 4294901760
    %v1400 = vsub.f32 %v1398, %v1399
    %v1401 = vand.u32 %v1400, 4294901760
    %1402 = vmatpush1.msra.mxu0 %v1401
    %v1403 = vand.u32 %v1007, 4294901760
    %v1404 = vsub.f32 %v1007, %v1403
    %v1405 = vand.u32 %v1404, 4294901760
    %v1406 = vsub.f32 %v1404, %v1405
    %v1407 = vand.u32 %v1406, 4294901760
    %1408 = vmatprep.subr.mxu0 %v1407
    %v1409 = vand.u32 %v1006, 4294901760
    %v1410 = vsub.f32 %v1006, %v1409
    %v1411 = vand.u32 %v1410, 4294901760
    %v1412 = vsub.f32 %v1410, %v1411
    %v1413 = vand.u32 %v1412, 4294901760
    %1414 = vmatpush1.msra.mxu0 %v1413
    %v1415 = vand.u32 %v1009, 4294901760
    %v1416 = vsub.f32 %v1009, %v1415
    %v1417 = vand.u32 %v1416, 4294901760
    %v1418 = vsub.f32 %v1416, %v1417
    %v1419 = vand.u32 %v1418, 4294901760
    %1420 = vmatprep.subr.mxu0 %v1419
    %v1421 = vand.u32 %v1008, 4294901760
    %v1422 = vsub.f32 %v1008, %v1421
    %v1423 = vand.u32 %v1422, 4294901760
    %v1424 = vsub.f32 %v1422, %v1423
    %v1425 = vand.u32 %v1424, 4294901760
    %1426 = vmatpush1.msra.mxu0 %v1425
    %v1427 = vand.u32 %v1011, 4294901760
    %v1428 = vsub.f32 %v1011, %v1427
    %v1429 = vand.u32 %v1428, 4294901760
    %v1430 = vsub.f32 %v1428, %v1429
    %v1431 = vand.u32 %v1430, 4294901760
    %1432 = vmatprep.subr.mxu0 %v1431
    %v1433 = vand.u32 %v1010, 4294901760
    %v1434 = vsub.f32 %v1010, %v1433
    %v1435 = vand.u32 %v1434, 4294901760
    %v1436 = vsub.f32 %v1434, %v1435
    %v1437 = vand.u32 %v1436, 4294901760
    %1438 = vmatpush1.msra.mxu0 %v1437
    %v1439 = vand.u32 %v1013, 4294901760
    %v1440 = vsub.f32 %v1013, %v1439
    %v1441 = vand.u32 %v1440, 4294901760
    %v1442 = vsub.f32 %v1440, %v1441
    %v1443 = vand.u32 %v1442, 4294901760
    %1444 = vmatprep.subr.mxu0 %v1443
    %v1445 = vand.u32 %v1012, 4294901760
    %v1446 = vsub.f32 %v1012, %v1445
    %v1447 = vand.u32 %v1446, 4294901760
    %v1448 = vsub.f32 %v1446, %v1447
    %v1449 = vand.u32 %v1448, 4294901760
    %1450 = vmatpush1.msra.mxu0 %v1449
    %v1451 = vand.u32 %v1015, 4294901760
    %v1452 = vsub.f32 %v1015, %v1451
    %v1453 = vand.u32 %v1452, 4294901760
    %v1454 = vsub.f32 %v1452, %v1453
    %v1455 = vand.u32 %v1454, 4294901760
    %1456 = vmatprep.subr.mxu0 %v1455
    %v1457 = vand.u32 %v1014, 4294901760
    %v1458 = vsub.f32 %v1014, %v1457
    %v1459 = vand.u32 %v1458, 4294901760
    %v1460 = vsub.f32 %v1458, %v1459
    %v1461 = vand.u32 %v1460, 4294901760
    %1462 = vmatpush1.msra.mxu0 %v1461
    %v1463 = vand.u32 %v1017, 4294901760
    %v1464 = vsub.f32 %v1017, %v1463
    %v1465 = vand.u32 %v1464, 4294901760
    %v1466 = vsub.f32 %v1464, %v1465
    %v1467 = vand.u32 %v1466, 4294901760
    %1468 = vmatprep.subr.mxu0 %v1467
    %v1469 = vand.u32 %v1016, 4294901760
    %v1470 = vsub.f32 %v1016, %v1469
    %v1471 = vand.u32 %v1470, 4294901760
    %v1472 = vsub.f32 %v1470, %v1471
    %v1473 = vand.u32 %v1472, 4294901760
    %1474 = vmatpush1.msra.mxu0 %v1473
    %v1475 = vand.u32 %v1019, 4294901760
    %v1476 = vsub.f32 %v1019, %v1475
    %v1477 = vand.u32 %v1476, 4294901760
    %v1478 = vsub.f32 %v1476, %v1477
    %v1479 = vand.u32 %v1478, 4294901760
    %1480 = vmatprep.subr.mxu0 %v1479
    %v1481 = vand.u32 %v1018, 4294901760
    %v1482 = vsub.f32 %v1018, %v1481
    %v1483 = vand.u32 %v1482, 4294901760
    %v1484 = vsub.f32 %v1482, %v1483
    %v1485 = vand.u32 %v1484, 4294901760
    %1486 = vmatpush1.msra.mxu0 %v1485
    %v1487 = vand.u32 %v1021, 4294901760
    %v1488 = vsub.f32 %v1021, %v1487
    %v1489 = vand.u32 %v1488, 4294901760
    %v1490 = vsub.f32 %v1488, %v1489
    %v1491 = vand.u32 %v1490, 4294901760
    %1492 = vmatprep.subr.mxu0 %v1491
    %v1493 = vand.u32 %v1020, 4294901760
    %v1494 = vsub.f32 %v1020, %v1493
    %v1495 = vand.u32 %v1494, 4294901760
    %v1496 = vsub.f32 %v1494, %v1495
    %v1497 = vand.u32 %v1496, 4294901760
    %1498 = vmatpush1.msra.mxu0 %v1497
    %v1499 = vand.u32 %v1023, 4294901760
    %v1500 = vsub.f32 %v1023, %v1499
    %v1501 = vand.u32 %v1500, 4294901760
    %v1502 = vsub.f32 %v1500, %v1501
    %v1503 = vand.u32 %v1502, 4294901760
    %1504 = vmatprep.subr.mxu0 %v1503
    %v1505 = vand.u32 %v1022, 4294901760
    %v1506 = vsub.f32 %v1022, %v1505
    %v1507 = vand.u32 %v1506, 4294901760
    %v1508 = vsub.f32 %v1506, %v1507
    %v1509 = vand.u32 %v1508, 4294901760
    %1510 = vmatpush1.msra.mxu0 %v1509
    %v1511 = vand.u32 %v1025, 4294901760
    %v1512 = vsub.f32 %v1025, %v1511
    %v1513 = vand.u32 %v1512, 4294901760
    %v1514 = vsub.f32 %v1512, %v1513
    %v1515 = vand.u32 %v1514, 4294901760
    %1516 = vmatprep.subr.mxu0 %v1515
    %v1517 = vand.u32 %v1024, 4294901760
    %v1518 = vsub.f32 %v1024, %v1517
    %v1519 = vand.u32 %v1518, 4294901760
    %v1520 = vsub.f32 %v1518, %v1519
    %v1521 = vand.u32 %v1520, 4294901760
    %1522 = vmatpush1.msra.mxu0 %v1521
    %v1523 = vand.u32 %v1027, 4294901760
    %v1524 = vsub.f32 %v1027, %v1523
    %v1525 = vand.u32 %v1524, 4294901760
    %v1526 = vsub.f32 %v1524, %v1525
    %v1527 = vand.u32 %v1526, 4294901760
    %1528 = vmatprep.subr.mxu0 %v1527
    %v1529 = vand.u32 %v1026, 4294901760
    %v1530 = vsub.f32 %v1026, %v1529
    %v1531 = vand.u32 %v1530, 4294901760
    %v1532 = vsub.f32 %v1530, %v1531
    %v1533 = vand.u32 %v1532, 4294901760
    %1534 = vmatpush1.msra.mxu0 %v1533
    %v1535 = vand.u32 %v1029, 4294901760
    %v1536 = vsub.f32 %v1029, %v1535
    %v1537 = vand.u32 %v1536, 4294901760
    %v1538 = vsub.f32 %v1536, %v1537
    %v1539 = vand.u32 %v1538, 4294901760
    %1540 = vmatprep.subr.mxu0 %v1539
    %v1541 = vand.u32 %v1028, 4294901760
    %v1542 = vsub.f32 %v1028, %v1541
    %v1543 = vand.u32 %v1542, 4294901760
    %v1544 = vsub.f32 %v1542, %v1543
    %v1545 = vand.u32 %v1544, 4294901760
    %1546 = vmatpush1.msra.mxu0 %v1545
    %v1547 = vand.u32 %v1031, 4294901760
    %v1548 = vsub.f32 %v1031, %v1547
    %v1549 = vand.u32 %v1548, 4294901760
    %v1550 = vsub.f32 %v1548, %v1549
    %v1551 = vand.u32 %v1550, 4294901760
    %1552 = vmatprep.subr.mxu0 %v1551
    %v1553 = vand.u32 %v1030, 4294901760
    %v1554 = vsub.f32 %v1030, %v1553
    %v1555 = vand.u32 %v1554, 4294901760
    %v1556 = vsub.f32 %v1554, %v1555
    %v1557 = vand.u32 %v1556, 4294901760
    %1558 = vmatpush1.msra.mxu0 %v1557
    %v1559 = vand.u32 %v1033, 4294901760
    %v1560 = vsub.f32 %v1033, %v1559
    %v1561 = vand.u32 %v1560, 4294901760
    %v1562 = vsub.f32 %v1560, %v1561
    %v1563 = vand.u32 %v1562, 4294901760
    %1564 = vmatprep.subr.mxu0 %v1563
    %v1565 = vand.u32 %v1032, 4294901760
    %v1566 = vsub.f32 %v1032, %v1565
    %v1567 = vand.u32 %v1566, 4294901760
    %v1568 = vsub.f32 %v1566, %v1567
    %v1569 = vand.u32 %v1568, 4294901760
    %1570 = vmatpush1.msra.mxu0 %v1569
    %v1571 = vand.u32 %v1035, 4294901760
    %v1572 = vsub.f32 %v1035, %v1571
    %v1573 = vand.u32 %v1572, 4294901760
    %v1574 = vsub.f32 %v1572, %v1573
    %v1575 = vand.u32 %v1574, 4294901760
    %1576 = vmatprep.subr.mxu0 %v1575
    %v1577 = vand.u32 %v1034, 4294901760
    %v1578 = vsub.f32 %v1034, %v1577
    %v1579 = vand.u32 %v1578, 4294901760
    %v1580 = vsub.f32 %v1578, %v1579
    %v1581 = vand.u32 %v1580, 4294901760
    %1582 = vmatpush1.msra.mxu0 %v1581
    %v1583 = vand.u32 %v1037, 4294901760
    %v1584 = vsub.f32 %v1037, %v1583
    %v1585 = vand.u32 %v1584, 4294901760
    %v1586 = vsub.f32 %v1584, %v1585
    %v1587 = vand.u32 %v1586, 4294901760
    %1588 = vmatprep.subr.mxu0 %v1587
    %v1589 = vand.u32 %v1036, 4294901760
    %v1590 = vsub.f32 %v1036, %v1589
    %v1591 = vand.u32 %v1590, 4294901760
    %v1592 = vsub.f32 %v1590, %v1591
    %v1593 = vand.u32 %v1592, 4294901760
    %1594 = vmatpush1.msra.mxu0 %v1593
    %v1595 = vand.u32 %v1039, 4294901760
    %v1596 = vsub.f32 %v1039, %v1595
    %v1597 = vand.u32 %v1596, 4294901760
    %v1598 = vsub.f32 %v1596, %v1597
    %v1599 = vand.u32 %v1598, 4294901760
    %1600 = vmatprep.subr.mxu0 %v1599
    %v1601 = vand.u32 %v1038, 4294901760
    %v1602 = vsub.f32 %v1038, %v1601
    %v1603 = vand.u32 %v1602, 4294901760
    %v1604 = vsub.f32 %v1602, %v1603
    %v1605 = vand.u32 %v1604, 4294901760
    %1606 = vmatpush1.msra.mxu0 %v1605
    %v1607 = vand.u32 %v1041, 4294901760
    %v1608 = vsub.f32 %v1041, %v1607
    %v1609 = vand.u32 %v1608, 4294901760
    %v1610 = vsub.f32 %v1608, %v1609
    %v1611 = vand.u32 %v1610, 4294901760
    %1612 = vmatprep.subr.mxu0 %v1611
    %v1613 = vand.u32 %v1040, 4294901760
    %v1614 = vsub.f32 %v1040, %v1613
    %v1615 = vand.u32 %v1614, 4294901760
    %v1616 = vsub.f32 %v1614, %v1615
    %v1617 = vand.u32 %v1616, 4294901760
    %1618 = vmatpush1.msra.mxu0 %v1617
    %v1619 = vand.u32 %v1043, 4294901760
    %v1620 = vsub.f32 %v1043, %v1619
    %v1621 = vand.u32 %v1620, 4294901760
    %v1622 = vsub.f32 %v1620, %v1621
    %v1623 = vand.u32 %v1622, 4294901760
    %1624 = vmatprep.subr.mxu0 %v1623
    %v1625 = vand.u32 %v1042, 4294901760
    %v1626 = vsub.f32 %v1042, %v1625
    %v1627 = vand.u32 %v1626, 4294901760
    %v1628 = vsub.f32 %v1626, %v1627
    %v1629 = vand.u32 %v1628, 4294901760
    %1630 = vmatpush1.msra.mxu0 %v1629
    %v1631 = vand.u32 %v1045, 4294901760
    %v1632 = vsub.f32 %v1045, %v1631
    %v1633 = vand.u32 %v1632, 4294901760
    %v1634 = vsub.f32 %v1632, %v1633
    %v1635 = vand.u32 %v1634, 4294901760
    %1636 = vmatprep.subr.mxu0 %v1635
    %v1637 = vand.u32 %v1044, 4294901760
    %v1638 = vsub.f32 %v1044, %v1637
    %v1639 = vand.u32 %v1638, 4294901760
    %v1640 = vsub.f32 %v1638, %v1639
    %v1641 = vand.u32 %v1640, 4294901760
    %1642 = vmatpush1.msra.mxu0 %v1641
    %v1643 = vand.u32 %v1047, 4294901760
    %v1644 = vsub.f32 %v1047, %v1643
    %v1645 = vand.u32 %v1644, 4294901760
    %v1646 = vsub.f32 %v1644, %v1645
    %v1647 = vand.u32 %v1646, 4294901760
    %1648 = vmatprep.subr.mxu0 %v1647
    %v1649 = vand.u32 %v1046, 4294901760
    %v1650 = vsub.f32 %v1046, %v1649
    %v1651 = vand.u32 %v1650, 4294901760
    %v1652 = vsub.f32 %v1650, %v1651
    %v1653 = vand.u32 %v1652, 4294901760
    %1654 = vmatpush1.msra.mxu0 %v1653
    %v1655 = vand.u32 %v1049, 4294901760
    %v1656 = vsub.f32 %v1049, %v1655
    %v1657 = vand.u32 %v1656, 4294901760
    %v1658 = vsub.f32 %v1656, %v1657
    %v1659 = vand.u32 %v1658, 4294901760
    %1660 = vmatprep.subr.mxu0 %v1659
    %v1661 = vand.u32 %v1048, 4294901760
    %v1662 = vsub.f32 %v1048, %v1661
    %v1663 = vand.u32 %v1662, 4294901760
    %v1664 = vsub.f32 %v1662, %v1663
    %v1665 = vand.u32 %v1664, 4294901760
    %1666 = vmatpush1.msra.mxu0 %v1665
    %v1667 = vand.u32 %v979, 4294901760
    %1668 = vmatprep.mubr.f32.mxu0 %v1667
    %v1669 = vand.u32 %v978, 4294901760
    %1670 = vmatmul.mubr.f32.gmra.mrb[0].mxu0 %v1669
    %v1671 = vpop.f32.mrb[0].mxu0
    %v1672 = vadd.f32 %v1231, %v1671
    %v1673 = vpop.f32.mrb[0].mxu0
    %v1674 = vadd.f32 %v1233, %v1673
    %v1675 = vand.u32 %v981, 4294901760
    %1676 = vmatprep.mubr.f32.mxu0 %v1675
    %v1677 = vand.u32 %v980, 4294901760
    %1678 = vmatmul.mubr.f32.gmra.mrb[0].mxu0 %v1677
    %v1679 = vpop.f32.mrb[0].mxu0
    %v1680 = vadd.f32 %v1247, %v1679
    %v1681 = vpop.f32.mrb[0].mxu0
    %v1682 = vadd.f32 %v1249, %v1681
    %v1683 = vand.u32 %v983, 4294901760
    %1684 = vmatprep.mubr.f32.mxu0 %v1683
    %v1685 = vand.u32 %v982, 4294901760
    %1686 = vmatmul.mubr.f32.gmra.mrb[0].mxu0 %v1685
    %v1687 = vpop.f32.mrb[0].mxu0
    %v1688 = vadd.f32 %v1263, %v1687
    %v1689 = vpop.f32.mrb[0].mxu0
    %v1690 = vadd.f32 %v1265, %v1689
    %v1691 = vand.u32 %v985, 4294901760
    %1692 = vmatprep.mubr.f32.mxu0 %v1691
    %v1693 = vand.u32 %v984, 4294901760
    %1694 = vmatmul.mubr.f32.gmra.mrb[0].mxu0 %v1693
    %v1695 = vpop.f32.mrb[0].mxu0
    %v1696 = vadd.f32 %v1279, %v1695
    %v1697 = vpop.f32.mrb[0].mxu0
    %v1698 = vadd.f32 %v1281, %v1697
    %1699 = vdwg.mxu0
    %v1700 = vand.u32 %v987, 4294901760
    %v1701 = vsub.f32 %v987, %v1700
    %1702 = vmatprep.subr.mxu0 %v1701
    %v1703 = vand.u32 %v986, 4294901760
    %v1704 = vsub.f32 %v986, %v1703
    %1705 = vmatpush1.msra.mxu0 %v1704
    %v1706 = vand.u32 %v989, 4294901760
    %v1707 = vsub.f32 %v989, %v1706
    %1708 = vmatprep.subr.mxu0 %v1707
    %v1709 = vand.u32 %v988, 4294901760
    %v1710 = vsub.f32 %v988, %v1709
    %1711 = vmatpush1.msra.mxu0 %v1710
    %v1712 = vand.u32 %v991, 4294901760
    %v1713 = vsub.f32 %v991, %v1712
    %1714 = vmatprep.subr.mxu0 %v1713
    %v1715 = vand.u32 %v990, 4294901760
    %v1716 = vsub.f32 %v990, %v1715
    %1717 = vmatpush1.msra.mxu0 %v1716
    %v1718 = vand.u32 %v993, 4294901760
    %v1719 = vsub.f32 %v993, %v1718
    %1720 = vmatprep.subr.mxu0 %v1719
    %v1721 = vand.u32 %v992, 4294901760
    %v1722 = vsub.f32 %v992, %v1721
    %1723 = vmatpush1.msra.mxu0 %v1722
    %v1724 = vand.u32 %v995, 4294901760
    %v1725 = vsub.f32 %v995, %v1724
    %1726 = vmatprep.subr.mxu0 %v1725
    %v1727 = vand.u32 %v994, 4294901760
    %v1728 = vsub.f32 %v994, %v1727
    %1729 = vmatpush1.msra.mxu0 %v1728
    %v1730 = vand.u32 %v997, 4294901760
    %v1731 = vsub.f32 %v997, %v1730
    %1732 = vmatprep.subr.mxu0 %v1731
    %v1733 = vand.u32 %v996, 4294901760
    %v1734 = vsub.f32 %v996, %v1733
    %1735 = vmatpush1.msra.mxu0 %v1734
    %v1736 = vand.u32 %v999, 4294901760
    %v1737 = vsub.f32 %v999, %v1736
    %1738 = vmatprep.subr.mxu0 %v1737
    %v1739 = vand.u32 %v998, 4294901760
    %v1740 = vsub.f32 %v998, %v1739
    %1741 = vmatpush1.msra.mxu0 %v1740
    %v1742 = vand.u32 %v1001, 4294901760
    %v1743 = vsub.f32 %v1001, %v1742
    %1744 = vmatprep.subr.mxu0 %v1743
    %v1745 = vand.u32 %v1000, 4294901760
    %v1746 = vsub.f32 %v1000, %v1745
    %1747 = vmatpush1.msra.mxu0 %v1746
    %v1748 = vand.u32 %v1003, 4294901760
    %v1749 = vsub.f32 %v1003, %v1748
    %1750 = vmatprep.subr.mxu0 %v1749
    %v1751 = vand.u32 %v1002, 4294901760
    %v1752 = vsub.f32 %v1002, %v1751
    %1753 = vmatpush1.msra.mxu0 %v1752
    %v1754 = vand.u32 %v1005, 4294901760
    %v1755 = vsub.f32 %v1005, %v1754
    %1756 = vmatprep.subr.mxu0 %v1755
    %v1757 = vand.u32 %v1004, 4294901760
    %v1758 = vsub.f32 %v1004, %v1757
    %1759 = vmatpush1.msra.mxu0 %v1758
    %v1760 = vand.u32 %v1007, 4294901760
    %v1761 = vsub.f32 %v1007, %v1760
    %1762 = vmatprep.subr.mxu0 %v1761
    %v1763 = vand.u32 %v1006, 4294901760
    %v1764 = vsub.f32 %v1006, %v1763
    %1765 = vmatpush1.msra.mxu0 %v1764
    %v1766 = vand.u32 %v1009, 4294901760
    %v1767 = vsub.f32 %v1009, %v1766
    %1768 = vmatprep.subr.mxu0 %v1767
    %v1769 = vand.u32 %v1008, 4294901760
    %v1770 = vsub.f32 %v1008, %v1769
    %1771 = vmatpush1.msra.mxu0 %v1770
    %v1772 = vand.u32 %v1011, 4294901760
    %v1773 = vsub.f32 %v1011, %v1772
    %1774 = vmatprep.subr.mxu0 %v1773
    %v1775 = vand.u32 %v1010, 4294901760
    %v1776 = vsub.f32 %v1010, %v1775
    %1777 = vmatpush1.msra.mxu0 %v1776
    %v1778 = vand.u32 %v1013, 4294901760
    %v1779 = vsub.f32 %v1013, %v1778
    %1780 = vmatprep.subr.mxu0 %v1779
    %v1781 = vand.u32 %v1012, 4294901760
    %v1782 = vsub.f32 %v1012, %v1781
    %1783 = vmatpush1.msra.mxu0 %v1782
    %v1784 = vand.u32 %v1015, 4294901760
    %v1785 = vsub.f32 %v1015, %v1784
    %1786 = vmatprep.subr.mxu0 %v1785
    %v1787 = vand.u32 %v1014, 4294901760
    %v1788 = vsub.f32 %v1014, %v1787
    %1789 = vmatpush1.msra.mxu0 %v1788
    %v1790 = vand.u32 %v1017, 4294901760
    %v1791 = vsub.f32 %v1017, %v1790
    %1792 = vmatprep.subr.mxu0 %v1791
    %v1793 = vand.u32 %v1016, 4294901760
    %v1794 = vsub.f32 %v1016, %v1793
    %1795 = vmatpush1.msra.mxu0 %v1794
    %v1796 = vand.u32 %v1019, 4294901760
    %v1797 = vsub.f32 %v1019, %v1796
    %1798 = vmatprep.subr.mxu0 %v1797
    %v1799 = vand.u32 %v1018, 4294901760
    %v1800 = vsub.f32 %v1018, %v1799
    %1801 = vmatpush1.msra.mxu0 %v1800
    %v1802 = vand.u32 %v1021, 4294901760
    %v1803 = vsub.f32 %v1021, %v1802
    %1804 = vmatprep.subr.mxu0 %v1803
    %v1805 = vand.u32 %v1020, 4294901760
    %v1806 = vsub.f32 %v1020, %v1805
    %1807 = vmatpush1.msra.mxu0 %v1806
    %v1808 = vand.u32 %v1023, 4294901760
    %v1809 = vsub.f32 %v1023, %v1808
    %1810 = vmatprep.subr.mxu0 %v1809
    %v1811 = vand.u32 %v1022, 4294901760
    %v1812 = vsub.f32 %v1022, %v1811
    %1813 = vmatpush1.msra.mxu0 %v1812
    %v1814 = vand.u32 %v1025, 4294901760
    %v1815 = vsub.f32 %v1025, %v1814
    %1816 = vmatprep.subr.mxu0 %v1815
    %v1817 = vand.u32 %v1024, 4294901760
    %v1818 = vsub.f32 %v1024, %v1817
    %1819 = vmatpush1.msra.mxu0 %v1818
    %v1820 = vand.u32 %v1027, 4294901760
    %v1821 = vsub.f32 %v1027, %v1820
    %1822 = vmatprep.subr.mxu0 %v1821
    %v1823 = vand.u32 %v1026, 4294901760
    %v1824 = vsub.f32 %v1026, %v1823
    %1825 = vmatpush1.msra.mxu0 %v1824
    %v1826 = vand.u32 %v1029, 4294901760
    %v1827 = vsub.f32 %v1029, %v1826
    %1828 = vmatprep.subr.mxu0 %v1827
    %v1829 = vand.u32 %v1028, 4294901760
    %v1830 = vsub.f32 %v1028, %v1829
    %1831 = vmatpush1.msra.mxu0 %v1830
    %v1832 = vand.u32 %v1031, 4294901760
    %v1833 = vsub.f32 %v1031, %v1832
    %1834 = vmatprep.subr.mxu0 %v1833
    %v1835 = vand.u32 %v1030, 4294901760
    %v1836 = vsub.f32 %v1030, %v1835
    %1837 = vmatpush1.msra.mxu0 %v1836
    %v1838 = vand.u32 %v1033, 4294901760
    %v1839 = vsub.f32 %v1033, %v1838
    %1840 = vmatprep.subr.mxu0 %v1839
    %v1841 = vand.u32 %v1032, 4294901760
    %v1842 = vsub.f32 %v1032, %v1841
    %1843 = vmatpush1.msra.mxu0 %v1842
    %v1844 = vand.u32 %v1035, 4294901760
    %v1845 = vsub.f32 %v1035, %v1844
    %1846 = vmatprep.subr.mxu0 %v1845
    %v1847 = vand.u32 %v1034, 4294901760
    %v1848 = vsub.f32 %v1034, %v1847
    %1849 = vmatpush1.msra.mxu0 %v1848
    %v1850 = vand.u32 %v1037, 4294901760
    %v1851 = vsub.f32 %v1037, %v1850
    %1852 = vmatprep.subr.mxu0 %v1851
    %v1853 = vand.u32 %v1036, 4294901760
    %v1854 = vsub.f32 %v1036, %v1853
    %1855 = vmatpush1.msra.mxu0 %v1854
    %v1856 = vand.u32 %v1039, 4294901760
    %v1857 = vsub.f32 %v1039, %v1856
    %1858 = vmatprep.subr.mxu0 %v1857
    %v1859 = vand.u32 %v1038, 4294901760
    %v1860 = vsub.f32 %v1038, %v1859
    %1861 = vmatpush1.msra.mxu0 %v1860
    %v1862 = vand.u32 %v1041, 4294901760
    %v1863 = vsub.f32 %v1041, %v1862
    %1864 = vmatprep.subr.mxu0 %v1863
    %v1865 = vand.u32 %v1040, 4294901760
    %v1866 = vsub.f32 %v1040, %v1865
    %1867 = vmatpush1.msra.mxu0 %v1866
    %v1868 = vand.u32 %v1043, 4294901760
    %v1869 = vsub.f32 %v1043, %v1868
    %1870 = vmatprep.subr.mxu0 %v1869
    %v1871 = vand.u32 %v1042, 4294901760
    %v1872 = vsub.f32 %v1042, %v1871
    %1873 = vmatpush1.msra.mxu0 %v1872
    %v1874 = vand.u32 %v1045, 4294901760
    %v1875 = vsub.f32 %v1045, %v1874
    %1876 = vmatprep.subr.mxu0 %v1875
    %v1877 = vand.u32 %v1044, 4294901760
    %v1878 = vsub.f32 %v1044, %v1877
    %1879 = vmatpush1.msra.mxu0 %v1878
    %v1880 = vand.u32 %v1047, 4294901760
    %v1881 = vsub.f32 %v1047, %v1880
    %1882 = vmatprep.subr.mxu0 %v1881
    %v1883 = vand.u32 %v1046, 4294901760
    %v1884 = vsub.f32 %v1046, %v1883
    %1885 = vmatpush1.msra.mxu0 %v1884
    %v1886 = vand.u32 %v1049, 4294901760
    %v1887 = vsub.f32 %v1049, %v1886
    %1888 = vmatprep.subr.mxu0 %v1887
    %v1889 = vand.u32 %v1048, 4294901760
    %v1890 = vsub.f32 %v1048, %v1889
    %1891 = vmatpush1.msra.mxu0 %v1890
    %v1892 = vand.u32 %v979, 4294901760
    %v1893 = vsub.f32 %v979, %v1892
    %1894 = vmatprep.mubr.f32.mxu0 %v1893
    %v1895 = vand.u32 %v978, 4294901760
    %v1896 = vsub.f32 %v978, %v1895
    %1897 = vmatmul.mubr.f32.gmra.mrb[0].mxu0 %v1896
    %v1898 = vpop.f32.mrb[0].mxu0
    %v1899 = vadd.f32 %v1672, %v1898
    %v1900 = vpop.f32.mrb[0].mxu0
    %v1901 = vadd.f32 %v1674, %v1900
    %v1902 = vand.u32 %v981, 4294901760
    %v1903 = vsub.f32 %v981, %v1902
    %1904 = vmatprep.mubr.f32.mxu0 %v1903
    %v1905 = vand.u32 %v980, 4294901760
    %v1906 = vsub.f32 %v980, %v1905
    %1907 = vmatmul.mubr.f32.gmra.mrb[0].mxu0 %v1906
    %v1908 = vpop.f32.mrb[0].mxu0
    %v1909 = vadd.f32 %v1680, %v1908
    %v1910 = vpop.f32.mrb[0].mxu0
    %v1911 = vadd.f32 %v1682, %v1910
    %v1912 = vand.u32 %v983, 4294901760
    %v1913 = vsub.f32 %v983, %v1912
    %1914 = vmatprep.mubr.f32.mxu0 %v1913
    %v1915 = vand.u32 %v982, 4294901760
    %v1916 = vsub.f32 %v982, %v1915
    %1917 = vmatmul.mubr.f32.gmra.mrb[0].mxu0 %v1916
    %v1918 = vpop.f32.mrb[0].mxu0
    %v1919 = vadd.f32 %v1688, %v1918
    %v1920 = vpop.f32.mrb[0].mxu0
    %v1921 = vadd.f32 %v1690, %v1920
    %v1922 = vand.u32 %v985, 4294901760
    %v1923 = vsub.f32 %v985, %v1922
    %1924 = vmatprep.mubr.f32.mxu0 %v1923
    %v1925 = vand.u32 %v984, 4294901760
    %v1926 = vsub.f32 %v984, %v1925
    %1927 = vmatmul.mubr.f32.gmra.mrb[0].mxu0 %v1926
    %v1928 = vpop.f32.mrb[0].mxu0
    %v1929 = vadd.f32 %v1696, %v1928
    %v1930 = vpop.f32.mrb[0].mxu0
    %v1931 = vadd.f32 %v1698, %v1930
    %1932 = vdwg.mxu0
    %v1933 = vand.u32 %v987, 4294901760
    %1934 = vmatprep.subr.mxu0 %v1933
    %v1935 = vand.u32 %v986, 4294901760
    %1936 = vmatpush1.msra.mxu0 %v1935
    %v1937 = vand.u32 %v989, 4294901760
    %1938 = vmatprep.subr.mxu0 %v1937
    %v1939 = vand.u32 %v988, 4294901760
    %1940 = vmatpush1.msra.mxu0 %v1939
    %v1941 = vand.u32 %v991, 4294901760
    %1942 = vmatprep.subr.mxu0 %v1941
    %v1943 = vand.u32 %v990, 4294901760
    %1944 = vmatpush1.msra.mxu0 %v1943
    %v1945 = vand.u32 %v993, 4294901760
    %1946 = vmatprep.subr.mxu0 %v1945
    %v1947 = vand.u32 %v992, 4294901760
    %1948 = vmatpush1.msra.mxu0 %v1947
    %v1949 = vand.u32 %v995, 4294901760
    %1950 = vmatprep.subr.mxu0 %v1949
    %v1951 = vand.u32 %v994, 4294901760
    %1952 = vmatpush1.msra.mxu0 %v1951
    %v1953 = vand.u32 %v997, 4294901760
    %1954 = vmatprep.subr.mxu0 %v1953
    %v1955 = vand.u32 %v996, 4294901760
    %1956 = vmatpush1.msra.mxu0 %v1955
    %v1957 = vand.u32 %v999, 4294901760
    %1958 = vmatprep.subr.mxu0 %v1957
    %v1959 = vand.u32 %v998, 4294901760
    %1960 = vmatpush1.msra.mxu0 %v1959
    %v1961 = vand.u32 %v1001, 4294901760
    %1962 = vmatprep.subr.mxu0 %v1961
    %v1963 = vand.u32 %v1000, 4294901760
    %1964 = vmatpush1.msra.mxu0 %v1963
    %v1965 = vand.u32 %v1003, 4294901760
    %1966 = vmatprep.subr.mxu0 %v1965
    %v1967 = vand.u32 %v1002, 4294901760
    %1968 = vmatpush1.msra.mxu0 %v1967
    %v1969 = vand.u32 %v1005, 4294901760
    %1970 = vmatprep.subr.mxu0 %v1969
    %v1971 = vand.u32 %v1004, 4294901760
    %1972 = vmatpush1.msra.mxu0 %v1971
    %v1973 = vand.u32 %v1007, 4294901760
    %1974 = vmatprep.subr.mxu0 %v1973
    %v1975 = vand.u32 %v1006, 4294901760
    %1976 = vmatpush1.msra.mxu0 %v1975
    %v1977 = vand.u32 %v1009, 4294901760
    %1978 = vmatprep.subr.mxu0 %v1977
    %v1979 = vand.u32 %v1008, 4294901760
    %1980 = vmatpush1.msra.mxu0 %v1979
    %v1981 = vand.u32 %v1011, 4294901760
    %1982 = vmatprep.subr.mxu0 %v1981
    %v1983 = vand.u32 %v1010, 4294901760
    %1984 = vmatpush1.msra.mxu0 %v1983
    %v1985 = vand.u32 %v1013, 4294901760
    %1986 = vmatprep.subr.mxu0 %v1985
    %v1987 = vand.u32 %v1012, 4294901760
    %1988 = vmatpush1.msra.mxu0 %v1987
    %v1989 = vand.u32 %v1015, 4294901760
    %1990 = vmatprep.subr.mxu0 %v1989
    %v1991 = vand.u32 %v1014, 4294901760
    %1992 = vmatpush1.msra.mxu0 %v1991
    %v1993 = vand.u32 %v1017, 4294901760
    %1994 = vmatprep.subr.mxu0 %v1993
    %v1995 = vand.u32 %v1016, 4294901760
    %1996 = vmatpush1.msra.mxu0 %v1995
    %v1997 = vand.u32 %v1019, 4294901760
    %1998 = vmatprep.subr.mxu0 %v1997
    %v1999 = vand.u32 %v1018, 4294901760
    %2000 = vmatpush1.msra.mxu0 %v1999
    %v2001 = vand.u32 %v1021, 4294901760
    %2002 = vmatprep.subr.mxu0 %v2001
    %v2003 = vand.u32 %v1020, 4294901760
    %2004 = vmatpush1.msra.mxu0 %v2003
    %v2005 = vand.u32 %v1023, 4294901760
    %2006 = vmatprep.subr.mxu0 %v2005
    %v2007 = vand.u32 %v1022, 4294901760
    %2008 = vmatpush1.msra.mxu0 %v2007
    %v2009 = vand.u32 %v1025, 4294901760
    %2010 = vmatprep.subr.mxu0 %v2009
    %v2011 = vand.u32 %v1024, 4294901760
    %2012 = vmatpush1.msra.mxu0 %v2011
    %v2013 = vand.u32 %v1027, 4294901760
    %2014 = vmatprep.subr.mxu0 %v2013
    %v2015 = vand.u32 %v1026, 4294901760
    %2016 = vmatpush1.msra.mxu0 %v2015
    %v2017 = vand.u32 %v1029, 4294901760
    %2018 = vmatprep.subr.mxu0 %v2017
    %v2019 = vand.u32 %v1028, 4294901760
    %2020 = vmatpush1.msra.mxu0 %v2019
    %v2021 = vand.u32 %v1031, 4294901760
    %2022 = vmatprep.subr.mxu0 %v2021
    %v2023 = vand.u32 %v1030, 4294901760
    %2024 = vmatpush1.msra.mxu0 %v2023
    %v2025 = vand.u32 %v1033, 4294901760
    %2026 = vmatprep.subr.mxu0 %v2025
    %v2027 = vand.u32 %v1032, 4294901760
    %2028 = vmatpush1.msra.mxu0 %v2027
    %v2029 = vand.u32 %v1035, 4294901760
    %2030 = vmatprep.subr.mxu0 %v2029
    %v2031 = vand.u32 %v1034, 4294901760
    %2032 = vmatpush1.msra.mxu0 %v2031
    %v2033 = vand.u32 %v1037, 4294901760
    %2034 = vmatprep.subr.mxu0 %v2033
    %v2035 = vand.u32 %v1036, 4294901760
    %2036 = vmatpush1.msra.mxu0 %v2035
    %v2037 = vand.u32 %v1039, 4294901760
    %2038 = vmatprep.subr.mxu0 %v2037
    %v2039 = vand.u32 %v1038, 4294901760
    %2040 = vmatpush1.msra.mxu0 %v2039
    %v2041 = vand.u32 %v1041, 4294901760
    %2042 = vmatprep.subr.mxu0 %v2041
    %v2043 = vand.u32 %v1040, 4294901760
    %2044 = vmatpush1.msra.mxu0 %v2043
    %v2045 = vand.u32 %v1043, 4294901760
    %2046 = vmatprep.subr.mxu0 %v2045
    %v2047 = vand.u32 %v1042, 4294901760
    %2048 = vmatpush1.msra.mxu0 %v2047
    %v2049 = vand.u32 %v1045, 4294901760
    %2050 = vmatprep.subr.mxu0 %v2049
    %v2051 = vand.u32 %v1044, 4294901760
    %2052 = vmatpush1.msra.mxu0 %v2051
    %v2053 = vand.u32 %v1047, 4294901760
    %2054 = vmatprep.subr.mxu0 %v2053
    %v2055 = vand.u32 %v1046, 4294901760
    %2056 = vmatpush1.msra.mxu0 %v2055
    %v2057 = vand.u32 %v1049, 4294901760
    %2058 = vmatprep.subr.mxu0 %v2057
    %v2059 = vand.u32 %v1048, 4294901760
    %2060 = vmatpush1.msra.mxu0 %v2059
    %v2061 = vand.u32 %v979, 4294901760
    %v2062 = vsub.f32 %v979, %v2061
    %v2063 = vand.u32 %v2062, 4294901760
    %2064 = vmatprep.mubr.f32.mxu0 %v2063
    %v2065 = vand.u32 %v978, 4294901760
    %v2066 = vsub.f32 %v978, %v2065
    %v2067 = vand.u32 %v2066, 4294901760
    %2068 = vmatmul.mubr.f32.gmra.mrb[0].mxu0 %v2067
    %v2069 = vpop.f32.mrb[0].mxu0
    %v2070 = vadd.f32 %v1899, %v2069
    %v2071 = vpop.f32.mrb[0].mxu0
    %v2072 = vadd.f32 %v1901, %v2071
    %v2073 = vand.u32 %v981, 4294901760
    %v2074 = vsub.f32 %v981, %v2073
    %v2075 = vand.u32 %v2074, 4294901760
    %2076 = vmatprep.mubr.f32.mxu0 %v2075
    %v2077 = vand.u32 %v980, 4294901760
    %v2078 = vsub.f32 %v980, %v2077
    %v2079 = vand.u32 %v2078, 4294901760
    %2080 = vmatmul.mubr.f32.gmra.mrb[0].mxu0 %v2079
    %v2081 = vpop.f32.mrb[0].mxu0
    %v2082 = vadd.f32 %v1909, %v2081
    %v2083 = vpop.f32.mrb[0].mxu0
    %v2084 = vadd.f32 %v1911, %v2083
    %v2085 = vand.u32 %v983, 4294901760
    %v2086 = vsub.f32 %v983, %v2085
    %v2087 = vand.u32 %v2086, 4294901760
    %2088 = vmatprep.mubr.f32.mxu0 %v2087
    %v2089 = vand.u32 %v982, 4294901760
    %v2090 = vsub.f32 %v982, %v2089
    %v2091 = vand.u32 %v2090, 4294901760
    %2092 = vmatmul.mubr.f32.gmra.mrb[0].mxu0 %v2091
    %v2093 = vpop.f32.mrb[0].mxu0
    %v2094 = vadd.f32 %v1919, %v2093
    %v2095 = vpop.f32.mrb[0].mxu0
    %v2096 = vadd.f32 %v1921, %v2095
    %v2097 = vand.u32 %v985, 4294901760
    %v2098 = vsub.f32 %v985, %v2097
    %v2099 = vand.u32 %v2098, 4294901760
    %2100 = vmatprep.mubr.f32.mxu0 %v2099
    %v2101 = vand.u32 %v984, 4294901760
    %v2102 = vsub.f32 %v984, %v2101
    %v2103 = vand.u32 %v2102, 4294901760
    %2104 = vmatmul.mubr.f32.gmra.mrb[0].mxu0 %v2103
    %v2105 = vpop.f32.mrb[0].mxu0
    %v2106 = vadd.f32 %v1929, %v2105
    %v2107 = vpop.f32.mrb[0].mxu0
    %v2108 = vadd.f32 %v1931, %v2107
    %2109 = vdwg.mxu0
    %v2110 = vand.u32 %v987, 4294901760
    %v2111 = vsub.f32 %v987, %v2110
    %v2112 = vand.u32 %v2111, 4294901760
    %2113 = vmatprep.subr.mxu0 %v2112
    %v2114 = vand.u32 %v986, 4294901760
    %v2115 = vsub.f32 %v986, %v2114
    %v2116 = vand.u32 %v2115, 4294901760
    %2117 = vmatpush1.msra.mxu0 %v2116
    %v2118 = vand.u32 %v989, 4294901760
    %v2119 = vsub.f32 %v989, %v2118
    %v2120 = vand.u32 %v2119, 4294901760
    %2121 = vmatprep.subr.mxu0 %v2120
    %v2122 = vand.u32 %v988, 4294901760
    %v2123 = vsub.f32 %v988, %v2122
    %v2124 = vand.u32 %v2123, 4294901760
    %2125 = vmatpush1.msra.mxu0 %v2124
    %v2126 = vand.u32 %v991, 4294901760
    %v2127 = vsub.f32 %v991, %v2126
    %v2128 = vand.u32 %v2127, 4294901760
    %2129 = vmatprep.subr.mxu0 %v2128
    %v2130 = vand.u32 %v990, 4294901760
    %v2131 = vsub.f32 %v990, %v2130
    %v2132 = vand.u32 %v2131, 4294901760
    %2133 = vmatpush1.msra.mxu0 %v2132
    %v2134 = vand.u32 %v993, 4294901760
    %v2135 = vsub.f32 %v993, %v2134
    %v2136 = vand.u32 %v2135, 4294901760
    %2137 = vmatprep.subr.mxu0 %v2136
    %v2138 = vand.u32 %v992, 4294901760
    %v2139 = vsub.f32 %v992, %v2138
    %v2140 = vand.u32 %v2139, 4294901760
    %2141 = vmatpush1.msra.mxu0 %v2140
    %v2142 = vand.u32 %v995, 4294901760
    %v2143 = vsub.f32 %v995, %v2142
    %v2144 = vand.u32 %v2143, 4294901760
    %2145 = vmatprep.subr.mxu0 %v2144
    %v2146 = vand.u32 %v994, 4294901760
    %v2147 = vsub.f32 %v994, %v2146
    %v2148 = vand.u32 %v2147, 4294901760
    %2149 = vmatpush1.msra.mxu0 %v2148
    %v2150 = vand.u32 %v997, 4294901760
    %v2151 = vsub.f32 %v997, %v2150
    %v2152 = vand.u32 %v2151, 4294901760
    %2153 = vmatprep.subr.mxu0 %v2152
    %v2154 = vand.u32 %v996, 4294901760
    %v2155 = vsub.f32 %v996, %v2154
    %v2156 = vand.u32 %v2155, 4294901760
    %2157 = vmatpush1.msra.mxu0 %v2156
    %v2158 = vand.u32 %v999, 4294901760
    %v2159 = vsub.f32 %v999, %v2158
    %v2160 = vand.u32 %v2159, 4294901760
    %2161 = vmatprep.subr.mxu0 %v2160
    %v2162 = vand.u32 %v998, 4294901760
    %v2163 = vsub.f32 %v998, %v2162
    %v2164 = vand.u32 %v2163, 4294901760
    %2165 = vmatpush1.msra.mxu0 %v2164
    %v2166 = vand.u32 %v1001, 4294901760
    %v2167 = vsub.f32 %v1001, %v2166
    %v2168 = vand.u32 %v2167, 4294901760
    %2169 = vmatprep.subr.mxu0 %v2168
    %v2170 = vand.u32 %v1000, 4294901760
    %v2171 = vsub.f32 %v1000, %v2170
    %v2172 = vand.u32 %v2171, 4294901760
    %2173 = vmatpush1.msra.mxu0 %v2172
    %v2174 = vand.u32 %v1003, 4294901760
    %v2175 = vsub.f32 %v1003, %v2174
    %v2176 = vand.u32 %v2175, 4294901760
    %2177 = vmatprep.subr.mxu0 %v2176
    %v2178 = vand.u32 %v1002, 4294901760
    %v2179 = vsub.f32 %v1002, %v2178
    %v2180 = vand.u32 %v2179, 4294901760
    %2181 = vmatpush1.msra.mxu0 %v2180
    %v2182 = vand.u32 %v1005, 4294901760
    %v2183 = vsub.f32 %v1005, %v2182
    %v2184 = vand.u32 %v2183, 4294901760
    %2185 = vmatprep.subr.mxu0 %v2184
    %v2186 = vand.u32 %v1004, 4294901760
    %v2187 = vsub.f32 %v1004, %v2186
    %v2188 = vand.u32 %v2187, 4294901760
    %2189 = vmatpush1.msra.mxu0 %v2188
    %v2190 = vand.u32 %v1007, 4294901760
    %v2191 = vsub.f32 %v1007, %v2190
    %v2192 = vand.u32 %v2191, 4294901760
    %2193 = vmatprep.subr.mxu0 %v2192
    %v2194 = vand.u32 %v1006, 4294901760
    %v2195 = vsub.f32 %v1006, %v2194
    %v2196 = vand.u32 %v2195, 4294901760
    %2197 = vmatpush1.msra.mxu0 %v2196
    %v2198 = vand.u32 %v1009, 4294901760
    %v2199 = vsub.f32 %v1009, %v2198
    %v2200 = vand.u32 %v2199, 4294901760
    %2201 = vmatprep.subr.mxu0 %v2200
    %v2202 = vand.u32 %v1008, 4294901760
    %v2203 = vsub.f32 %v1008, %v2202
    %v2204 = vand.u32 %v2203, 4294901760
    %2205 = vmatpush1.msra.mxu0 %v2204
    %v2206 = vand.u32 %v1011, 4294901760
    %v2207 = vsub.f32 %v1011, %v2206
    %v2208 = vand.u32 %v2207, 4294901760
    %2209 = vmatprep.subr.mxu0 %v2208
    %v2210 = vand.u32 %v1010, 4294901760
    %v2211 = vsub.f32 %v1010, %v2210
    %v2212 = vand.u32 %v2211, 4294901760
    %2213 = vmatpush1.msra.mxu0 %v2212
    %v2214 = vand.u32 %v1013, 4294901760
    %v2215 = vsub.f32 %v1013, %v2214
    %v2216 = vand.u32 %v2215, 4294901760
    %2217 = vmatprep.subr.mxu0 %v2216
    %v2218 = vand.u32 %v1012, 4294901760
    %v2219 = vsub.f32 %v1012, %v2218
    %v2220 = vand.u32 %v2219, 4294901760
    %2221 = vmatpush1.msra.mxu0 %v2220
    %v2222 = vand.u32 %v1015, 4294901760
    %v2223 = vsub.f32 %v1015, %v2222
    %v2224 = vand.u32 %v2223, 4294901760
    %2225 = vmatprep.subr.mxu0 %v2224
    %v2226 = vand.u32 %v1014, 4294901760
    %v2227 = vsub.f32 %v1014, %v2226
    %v2228 = vand.u32 %v2227, 4294901760
    %2229 = vmatpush1.msra.mxu0 %v2228
    %v2230 = vand.u32 %v1017, 4294901760
    %v2231 = vsub.f32 %v1017, %v2230
    %v2232 = vand.u32 %v2231, 4294901760
    %2233 = vmatprep.subr.mxu0 %v2232
    %v2234 = vand.u32 %v1016, 4294901760
    %v2235 = vsub.f32 %v1016, %v2234
    %v2236 = vand.u32 %v2235, 4294901760
    %2237 = vmatpush1.msra.mxu0 %v2236
    %v2238 = vand.u32 %v1019, 4294901760
    %v2239 = vsub.f32 %v1019, %v2238
    %v2240 = vand.u32 %v2239, 4294901760
    %2241 = vmatprep.subr.mxu0 %v2240
    %v2242 = vand.u32 %v1018, 4294901760
    %v2243 = vsub.f32 %v1018, %v2242
    %v2244 = vand.u32 %v2243, 4294901760
    %2245 = vmatpush1.msra.mxu0 %v2244
    %v2246 = vand.u32 %v1021, 4294901760
    %v2247 = vsub.f32 %v1021, %v2246
    %v2248 = vand.u32 %v2247, 4294901760
    %2249 = vmatprep.subr.mxu0 %v2248
    %v2250 = vand.u32 %v1020, 4294901760
    %v2251 = vsub.f32 %v1020, %v2250
    %v2252 = vand.u32 %v2251, 4294901760
    %2253 = vmatpush1.msra.mxu0 %v2252
    %v2254 = vand.u32 %v1023, 4294901760
    %v2255 = vsub.f32 %v1023, %v2254
    %v2256 = vand.u32 %v2255, 4294901760
    %2257 = vmatprep.subr.mxu0 %v2256
    %v2258 = vand.u32 %v1022, 4294901760
    %v2259 = vsub.f32 %v1022, %v2258
    %v2260 = vand.u32 %v2259, 4294901760
    %2261 = vmatpush1.msra.mxu0 %v2260
    %v2262 = vand.u32 %v1025, 4294901760
    %v2263 = vsub.f32 %v1025, %v2262
    %v2264 = vand.u32 %v2263, 4294901760
    %2265 = vmatprep.subr.mxu0 %v2264
    %v2266 = vand.u32 %v1024, 4294901760
    %v2267 = vsub.f32 %v1024, %v2266
    %v2268 = vand.u32 %v2267, 4294901760
    %2269 = vmatpush1.msra.mxu0 %v2268
    %v2270 = vand.u32 %v1027, 4294901760
    %v2271 = vsub.f32 %v1027, %v2270
    %v2272 = vand.u32 %v2271, 4294901760
    %2273 = vmatprep.subr.mxu0 %v2272
    %v2274 = vand.u32 %v1026, 4294901760
    %v2275 = vsub.f32 %v1026, %v2274
    %v2276 = vand.u32 %v2275, 4294901760
    %2277 = vmatpush1.msra.mxu0 %v2276
    %v2278 = vand.u32 %v1029, 4294901760
    %v2279 = vsub.f32 %v1029, %v2278
    %v2280 = vand.u32 %v2279, 4294901760
    %2281 = vmatprep.subr.mxu0 %v2280
    %v2282 = vand.u32 %v1028, 4294901760
    %v2283 = vsub.f32 %v1028, %v2282
    %v2284 = vand.u32 %v2283, 4294901760
    %2285 = vmatpush1.msra.mxu0 %v2284
    %v2286 = vand.u32 %v1031, 4294901760
    %v2287 = vsub.f32 %v1031, %v2286
    %v2288 = vand.u32 %v2287, 4294901760
    %2289 = vmatprep.subr.mxu0 %v2288
    %v2290 = vand.u32 %v1030, 4294901760
    %v2291 = vsub.f32 %v1030, %v2290
    %v2292 = vand.u32 %v2291, 4294901760
    %2293 = vmatpush1.msra.mxu0 %v2292
    %v2294 = vand.u32 %v1033, 4294901760
    %v2295 = vsub.f32 %v1033, %v2294
    %v2296 = vand.u32 %v2295, 4294901760
    %2297 = vmatprep.subr.mxu0 %v2296
    %v2298 = vand.u32 %v1032, 4294901760
    %v2299 = vsub.f32 %v1032, %v2298
    %v2300 = vand.u32 %v2299, 4294901760
    %2301 = vmatpush1.msra.mxu0 %v2300
    %v2302 = vand.u32 %v1035, 4294901760
    %v2303 = vsub.f32 %v1035, %v2302
    %v2304 = vand.u32 %v2303, 4294901760
    %2305 = vmatprep.subr.mxu0 %v2304
    %v2306 = vand.u32 %v1034, 4294901760
    %v2307 = vsub.f32 %v1034, %v2306
    %v2308 = vand.u32 %v2307, 4294901760
    %2309 = vmatpush1.msra.mxu0 %v2308
    %v2310 = vand.u32 %v1037, 4294901760
    %v2311 = vsub.f32 %v1037, %v2310
    %v2312 = vand.u32 %v2311, 4294901760
    %2313 = vmatprep.subr.mxu0 %v2312
    %v2314 = vand.u32 %v1036, 4294901760
    %v2315 = vsub.f32 %v1036, %v2314
    %v2316 = vand.u32 %v2315, 4294901760
    %2317 = vmatpush1.msra.mxu0 %v2316
    %v2318 = vand.u32 %v1039, 4294901760
    %v2319 = vsub.f32 %v1039, %v2318
    %v2320 = vand.u32 %v2319, 4294901760
    %2321 = vmatprep.subr.mxu0 %v2320
    %v2322 = vand.u32 %v1038, 4294901760
    %v2323 = vsub.f32 %v1038, %v2322
    %v2324 = vand.u32 %v2323, 4294901760
    %2325 = vmatpush1.msra.mxu0 %v2324
    %v2326 = vand.u32 %v1041, 4294901760
    %v2327 = vsub.f32 %v1041, %v2326
    %v2328 = vand.u32 %v2327, 4294901760
    %2329 = vmatprep.subr.mxu0 %v2328
    %v2330 = vand.u32 %v1040, 4294901760
    %v2331 = vsub.f32 %v1040, %v2330
    %v2332 = vand.u32 %v2331, 4294901760
    %2333 = vmatpush1.msra.mxu0 %v2332
    %v2334 = vand.u32 %v1043, 4294901760
    %v2335 = vsub.f32 %v1043, %v2334
    %v2336 = vand.u32 %v2335, 4294901760
    %2337 = vmatprep.subr.mxu0 %v2336
    %v2338 = vand.u32 %v1042, 4294901760
    %v2339 = vsub.f32 %v1042, %v2338
    %v2340 = vand.u32 %v2339, 4294901760
    %2341 = vmatpush1.msra.mxu0 %v2340
    %v2342 = vand.u32 %v1045, 4294901760
    %v2343 = vsub.f32 %v1045, %v2342
    %v2344 = vand.u32 %v2343, 4294901760
    %2345 = vmatprep.subr.mxu0 %v2344
    %v2346 = vand.u32 %v1044, 4294901760
    %v2347 = vsub.f32 %v1044, %v2346
    %v2348 = vand.u32 %v2347, 4294901760
    %2349 = vmatpush1.msra.mxu0 %v2348
    %v2350 = vand.u32 %v1047, 4294901760
    %v2351 = vsub.f32 %v1047, %v2350
    %v2352 = vand.u32 %v2351, 4294901760
    %2353 = vmatprep.subr.mxu0 %v2352
    %v2354 = vand.u32 %v1046, 4294901760
    %v2355 = vsub.f32 %v1046, %v2354
    %v2356 = vand.u32 %v2355, 4294901760
    %2357 = vmatpush1.msra.mxu0 %v2356
    %v2358 = vand.u32 %v1049, 4294901760
    %v2359 = vsub.f32 %v1049, %v2358
    %v2360 = vand.u32 %v2359, 4294901760
    %2361 = vmatprep.subr.mxu0 %v2360
    %v2362 = vand.u32 %v1048, 4294901760
    %v2363 = vsub.f32 %v1048, %v2362
    %v2364 = vand.u32 %v2363, 4294901760
    %2365 = vmatpush1.msra.mxu0 %v2364
    %v2366 = vand.u32 %v979, 4294901760
    %2367 = vmatprep.mubr.f32.mxu0 %v2366
    %v2368 = vand.u32 %v978, 4294901760
    %2369 = vmatmul.mubr.f32.gmra.mrb[0].mxu0 %v2368
    %v2370 = vpop.f32.mrb[0].mxu0
    %v2371 = vadd.f32 %v2070, %v2370
    %v2372 = vpop.f32.mrb[0].mxu0
    %v2373 = vadd.f32 %v2072, %v2372
    %v2374 = vand.u32 %v981, 4294901760
    %2375 = vmatprep.mubr.f32.mxu0 %v2374
    %v2376 = vand.u32 %v980, 4294901760
    %2377 = vmatmul.mubr.f32.gmra.mrb[0].mxu0 %v2376
    %v2378 = vpop.f32.mrb[0].mxu0
    %v2379 = vadd.f32 %v2082, %v2378
    %v2380 = vpop.f32.mrb[0].mxu0
    %v2381 = vadd.f32 %v2084, %v2380
    %v2382 = vand.u32 %v983, 4294901760
    %2383 = vmatprep.mubr.f32.mxu0 %v2382
    %v2384 = vand.u32 %v982, 4294901760
    %2385 = vmatmul.mubr.f32.gmra.mrb[0].mxu0 %v2384
    %v2386 = vpop.f32.mrb[0].mxu0
    %v2387 = vadd.f32 %v2094, %v2386
    %v2388 = vpop.f32.mrb[0].mxu0
    %v2389 = vadd.f32 %v2096, %v2388
    %v2390 = vand.u32 %v985, 4294901760
    %2391 = vmatprep.mubr.f32.mxu0 %v2390
    %v2392 = vand.u32 %v984, 4294901760
    %2393 = vmatmul.mubr.f32.gmra.mrb[0].mxu0 %v2392
    %v2394 = vpop.f32.mrb[0].mxu0
    %v2395 = vadd.f32 %v2106, %v2394
    %v2396 = vpop.f32.mrb[0].mxu0
    %v2397 = vadd.f32 %v2108, %v2396
    %2398 = vdwg.mxu0
    %v2399 = vand.u32 %v987, 4294901760
    %2400 = vmatprep.subr.mxu0 %v2399
    %v2401 = vand.u32 %v986, 4294901760
    %2402 = vmatpush1.msra.mxu0 %v2401
    %v2403 = vand.u32 %v989, 4294901760
    %2404 = vmatprep.subr.mxu0 %v2403
    %v2405 = vand.u32 %v988, 4294901760
    %2406 = vmatpush1.msra.mxu0 %v2405
    %v2407 = vand.u32 %v991, 4294901760
    %2408 = vmatprep.subr.mxu0 %v2407
    %v2409 = vand.u32 %v990, 4294901760
    %2410 = vmatpush1.msra.mxu0 %v2409
    %v2411 = vand.u32 %v993, 4294901760
    %2412 = vmatprep.subr.mxu0 %v2411
    %v2413 = vand.u32 %v992, 4294901760
    %2414 = vmatpush1.msra.mxu0 %v2413
    %v2415 = vand.u32 %v995, 4294901760
    %2416 = vmatprep.subr.mxu0 %v2415
    %v2417 = vand.u32 %v994, 4294901760
    %2418 = vmatpush1.msra.mxu0 %v2417
    %v2419 = vand.u32 %v997, 4294901760
    %2420 = vmatprep.subr.mxu0 %v2419
    %v2421 = vand.u32 %v996, 4294901760
    %2422 = vmatpush1.msra.mxu0 %v2421
    %v2423 = vand.u32 %v999, 4294901760
    %2424 = vmatprep.subr.mxu0 %v2423
    %v2425 = vand.u32 %v998, 4294901760
    %2426 = vmatpush1.msra.mxu0 %v2425
    %v2427 = vand.u32 %v1001, 4294901760
    %2428 = vmatprep.subr.mxu0 %v2427
    %v2429 = vand.u32 %v1000, 4294901760
    %2430 = vmatpush1.msra.mxu0 %v2429
    %v2431 = vand.u32 %v1003, 4294901760
    %2432 = vmatprep.subr.mxu0 %v2431
    %v2433 = vand.u32 %v1002, 4294901760
    %2434 = vmatpush1.msra.mxu0 %v2433
    %v2435 = vand.u32 %v1005, 4294901760
    %2436 = vmatprep.subr.mxu0 %v2435
    %v2437 = vand.u32 %v1004, 4294901760
    %2438 = vmatpush1.msra.mxu0 %v2437
    %v2439 = vand.u32 %v1007, 4294901760
    %2440 = vmatprep.subr.mxu0 %v2439
    %v2441 = vand.u32 %v1006, 4294901760
    %2442 = vmatpush1.msra.mxu0 %v2441
    %v2443 = vand.u32 %v1009, 4294901760
    %2444 = vmatprep.subr.mxu0 %v2443
    %v2445 = vand.u32 %v1008, 4294901760
    %2446 = vmatpush1.msra.mxu0 %v2445
    %v2447 = vand.u32 %v1011, 4294901760
    %2448 = vmatprep.subr.mxu0 %v2447
    %v2449 = vand.u32 %v1010, 4294901760
    %2450 = vmatpush1.msra.mxu0 %v2449
    %v2451 = vand.u32 %v1013, 4294901760
    %2452 = vmatprep.subr.mxu0 %v2451
    %v2453 = vand.u32 %v1012, 4294901760
    %2454 = vmatpush1.msra.mxu0 %v2453
    %v2455 = vand.u32 %v1015, 4294901760
    %2456 = vmatprep.subr.mxu0 %v2455
    %v2457 = vand.u32 %v1014, 4294901760
    %2458 = vmatpush1.msra.mxu0 %v2457
    %v2459 = vand.u32 %v1017, 4294901760
    %2460 = vmatprep.subr.mxu0 %v2459
    %v2461 = vand.u32 %v1016, 4294901760
    %2462 = vmatpush1.msra.mxu0 %v2461
    %v2463 = vand.u32 %v1019, 4294901760
    %2464 = vmatprep.subr.mxu0 %v2463
    %v2465 = vand.u32 %v1018, 4294901760
    %2466 = vmatpush1.msra.mxu0 %v2465
    %v2467 = vand.u32 %v1021, 4294901760
    %2468 = vmatprep.subr.mxu0 %v2467
    %v2469 = vand.u32 %v1020, 4294901760
    %2470 = vmatpush1.msra.mxu0 %v2469
    %v2471 = vand.u32 %v1023, 4294901760
    %2472 = vmatprep.subr.mxu0 %v2471
    %v2473 = vand.u32 %v1022, 4294901760
    %2474 = vmatpush1.msra.mxu0 %v2473
    %v2475 = vand.u32 %v1025, 4294901760
    %2476 = vmatprep.subr.mxu0 %v2475
    %v2477 = vand.u32 %v1024, 4294901760
    %2478 = vmatpush1.msra.mxu0 %v2477
    %v2479 = vand.u32 %v1027, 4294901760
    %2480 = vmatprep.subr.mxu0 %v2479
    %v2481 = vand.u32 %v1026, 4294901760
    %2482 = vmatpush1.msra.mxu0 %v2481
    %v2483 = vand.u32 %v1029, 4294901760
    %2484 = vmatprep.subr.mxu0 %v2483
    %v2485 = vand.u32 %v1028, 4294901760
    %2486 = vmatpush1.msra.mxu0 %v2485
    %v2487 = vand.u32 %v1031, 4294901760
    %2488 = vmatprep.subr.mxu0 %v2487
    %v2489 = vand.u32 %v1030, 4294901760
    %2490 = vmatpush1.msra.mxu0 %v2489
    %v2491 = vand.u32 %v1033, 4294901760
    %2492 = vmatprep.subr.mxu0 %v2491
    %v2493 = vand.u32 %v1032, 4294901760
    %2494 = vmatpush1.msra.mxu0 %v2493
    %v2495 = vand.u32 %v1035, 4294901760
    %2496 = vmatprep.subr.mxu0 %v2495
    %v2497 = vand.u32 %v1034, 4294901760
    %2498 = vmatpush1.msra.mxu0 %v2497
    %v2499 = vand.u32 %v1037, 4294901760
    %2500 = vmatprep.subr.mxu0 %v2499
    %v2501 = vand.u32 %v1036, 4294901760
    %2502 = vmatpush1.msra.mxu0 %v2501
    %v2503 = vand.u32 %v1039, 4294901760
    %2504 = vmatprep.subr.mxu0 %v2503
    %v2505 = vand.u32 %v1038, 4294901760
    %2506 = vmatpush1.msra.mxu0 %v2505
    %v2507 = vand.u32 %v1041, 4294901760
    %2508 = vmatprep.subr.mxu0 %v2507
    %v2509 = vand.u32 %v1040, 4294901760
    %2510 = vmatpush1.msra.mxu0 %v2509
    %v2511 = vand.u32 %v1043, 4294901760
    %2512 = vmatprep.subr.mxu0 %v2511
    %v2513 = vand.u32 %v1042, 4294901760
    %2514 = vmatpush1.msra.mxu0 %v2513
    %v2515 = vand.u32 %v1045, 4294901760
    %2516 = vmatprep.subr.mxu0 %v2515
    %v2517 = vand.u32 %v1044, 4294901760
    %2518 = vmatpush1.msra.mxu0 %v2517
    %v2519 = vand.u32 %v1047, 4294901760
    %2520 = vmatprep.subr.mxu0 %v2519
    %v2521 = vand.u32 %v1046, 4294901760
    %2522 = vmatpush1.msra.mxu0 %v2521
    %v2523 = vand.u32 %v1049, 4294901760
    %2524 = vmatprep.subr.mxu0 %v2523
    %v2525 = vand.u32 %v1048, 4294901760
    %2526 = vmatpush1.msra.mxu0 %v2525
    %v2527 = vand.u32 %v979, 4294901760
    %2528 = vmatprep.mubr.f32.mxu0 %v2527
    %v2529 = vand.u32 %v978, 4294901760
    %2530 = vmatmul.mubr.f32.gmra.mrb[0].mxu0 %v2529
    %v2531 = vpop.f32.mrb[0].mxu0
    %v2532 = vadd.f32 %v2371, %v2531
    %v2533 = vpop.f32.mrb[0].mxu0
    %v2534 = vadd.f32 %v2373, %v2533
    %v2535 = vand.u32 %v981, 4294901760
    %2536 = vmatprep.mubr.f32.mxu0 %v2535
    %v2537 = vand.u32 %v980, 4294901760
    %2538 = vmatmul.mubr.f32.gmra.mrb[0].mxu0 %v2537
    %v2539 = vpop.f32.mrb[0].mxu0
    %v2540 = vadd.f32 %v2379, %v2539
    %v2541 = vpop.f32.mrb[0].mxu0
    %v2542 = vadd.f32 %v2381, %v2541
    %v2543 = vand.u32 %v983, 4294901760
    %2544 = vmatprep.mubr.f32.mxu0 %v2543
    %v2545 = vand.u32 %v982, 4294901760
    %2546 = vmatmul.mubr.f32.gmra.mrb[0].mxu0 %v2545
    %v2547 = vpop.f32.mrb[0].mxu0
    %v2548 = vadd.f32 %v2387, %v2547
    %v2549 = vpop.f32.mrb[0].mxu0
    %v2550 = vadd.f32 %v2389, %v2549
    %v2551 = vand.u32 %v985, 4294901760
    %2552 = vmatprep.mubr.f32.mxu0 %v2551
    %v2553 = vand.u32 %v984, 4294901760
    %2554 = vmatmul.mubr.f32.gmra.mrb[0].mxu0 %v2553
    %v2555 = vpop.f32.mrb[0].mxu0
    %v2556 = vadd.f32 %v2395, %v2555
    %v2557 = vpop.f32.mrb[0].mxu0
    %v2558 = vadd.f32 %v2397, %v2557
    %2559 = vdwg.mxu0
    %v2560 = vmin.f32 %v2532, %v2534
    %2561 = vmin.xlane.f32.xlu0 %v2560
    %v2562 = vpop.xlane.xlu0 %2561
    %v2563 = vmin.f32 %v2540, %v2542
    %2564 = vmin.xlane.f32.xlu0 %v2563
    %v2565 = vpop.xlane.xlu0 %2564
    %v2566 = vmin.f32 %v2548, %v2550
    %2567 = vmin.xlane.f32.xlu0 %v2566
    %v2568 = vpop.xlane.xlu0 %2567
    %v2569 = vmin.f32 %v2556, %v2558
    %2570 = vmin.xlane.f32.xlu0 %v2569
    %v2571 = vpop.xlane.xlu0 %2570
    %v2572 = vmax.f32 %v2532, %v2534
    %2573 = vmax.xlane.f32.xlu0 %v2572
    %v2574 = vpop.xlane.xlu0 %2573
    %v2575 = vmax.f32 %v2540, %v2542
    %2576 = vmax.xlane.f32.xlu0 %v2575
    %v2577 = vpop.xlane.xlu0 %2576
    %v2578 = vmax.f32 %v2548, %v2550
    %2579 = vmax.xlane.f32.xlu0 %v2578
    %v2580 = vpop.xlane.xlu0 %2579
    %v2581 = vmax.f32 %v2556, %v2558
    %2582 = vmax.xlane.f32.xlu0 %v2581
    %v2583 = vpop.xlane.xlu0 %2582
    %v2584 = vsub.f32 %v2574, %v2562
    %v2585 = vsub.f32 %v2577, %v2565
    %v2586 = vsub.f32 %v2580, %v2568
    %v2587 = vsub.f32 %v2583, %v2571
    %vm2588 = vcmp.eq.f32.partialorder %v2584, 0.0
    %vm2589 = vcmp.eq.f32.partialorder %v2585, 0.0
    %vm2590 = vcmp.eq.f32.partialorder %v2586, 0.0
    %vm2591 = vcmp.eq.f32.partialorder %v2587, 0.0
    %v2592 = vsel %vm2588, 1.0, %v2584
    %v2593 = vsel %vm2589, 1.0, %v2585
    %v2594 = vsel %vm2590, 1.0, %v2586
    %v2595 = vsel %vm2591, 1.0, %v2587
    %v2596 = vrcp.pop %v2592
    %v2597 = vrcp.pop %v2593
    %v2598 = vrcp.pop %v2594
    %v2599 = vrcp.pop %v2595
    %v2600 = vmul.f32 %v2596, 0.042557
    %v2601 = vmul.f32 %v2597, 0.042557
    %v2602 = vmul.f32 %v2598, 0.042557
    %v2603 = vmul.f32 %v2599, 0.042557
    %v2604 = vsub.f32 %v2532, %v2562
    %v2605 = vsub.f32 %v2534, %v2562
    %v2606 = vsub.f32 %v2540, %v2565
    %v2607 = vsub.f32 %v2542, %v2565
    %v2608 = vsub.f32 %v2548, %v2568
    %v2609 = vsub.f32 %v2550, %v2568
    %v2610 = vsub.f32 %v2556, %v2571
    %v2611 = vsub.f32 %v2558, %v2571
    %v2612 = vmul.f32 %v2604, %v2600
    %v2613 = vmul.f32 %v2605, %v2600
    %v2614 = vmul.f32 %v2606, %v2601
    %v2615 = vmul.f32 %v2607, %v2601
    %v2616 = vmul.f32 %v2608, %v2602
    %v2617 = vmul.f32 %v2609, %v2602
    %v2618 = vmul.f32 %v2610, %v2603
    %v2619 = vmul.f32 %v2611, %v2603
    %v2620 = vadd.f32 %v2612, -0.01563
    %v2621 = vadd.f32 %v2613, -0.01563
    %v2622 = vadd.f32 %v2614, -0.01563
    %v2623 = vadd.f32 %v2615, -0.01563
    %v2624 = vadd.f32 %v2616, -0.01563
    %v2625 = vadd.f32 %v2617, -0.01563
    %v2626 = vadd.f32 %v2618, -0.01563
    %v2627 = vadd.f32 %v2619, -0.01563
    %s2628 = smul.u32 0, 2
    %s2629 = smul.addr %s2628, 8
    %s2630 = scalar_lea.vmem [#allocation5], %s2629
    %2631 = vst [vmem:[%s2630] sm:$0xff] %v2620
    %2632 = vst [vmem:[%s2630 + $0x8] sm:$0xff] %v2621
    %2633 = vst [vmem:[%s2630 + $0x10] sm:$0xff] %v2622
    %2634 = vst [vmem:[%s2630 + $0x18] sm:$0xff] %v2623
    %2635 = vst [vmem:[%s2630 + $0x20] sm:$0xff] %v2624
    %2636 = vst [vmem:[%s2630 + $0x28] sm:$0xff] %v2625
    %2637 = vst [vmem:[%s2630 + $0x30] sm:$0xff] %v2626
    %2638 = vst [vmem:[%s2630 + $0x38] sm:$0xff] %v2627
    // Predicated region
    $region30: #{tpu_custom_call.1} parent=1 // pred_check
      _
    $region31: #{tpu_custom_call.1} parent=1 // pred_check_branch
      %2640 = sbr.rel (0) target = $region33
    $region32: #{tpu_custom_call.1} parent=1 // pred_region
      %s2642 = ssub.s32 1024, 1024
      %2643 = vsyncadd [#allocation4], %s2642
      %s2644 = sshll.u32 [#allocation5], 4
      %s2645 = int_to_ptr.vmem [resolvable:$true] %s2644
      %2650 = dma.vmem_to_hbm [thread:$0]  %s2645, 1024, %s6, [#allocation4], 256, 256, 16
    $region33: #{tpu_custom_call.1} parent=1 // pred_fallthru
      _
    // Predicated region
    $region34: #{tpu_custom_call.1} parent=1 // pred_check
      _
    $region35: #{tpu_custom_call.1} parent=1 // pred_check_branch
      %2652 = sbr.rel (0) target = $region37
    $region36: #{tpu_custom_call.1} parent=1 // pred_region
      %2653 = dma.done [#allocation4], 1024
    $region37: #{tpu_custom_call.1} parent=1 // pred_fallthru
      _
    %2654 = vsyncpa [#allocation3], 1
    %2655 = vsyncpa [#allocation4], 1

</llo_original>
